<compile_context>
chip_gen: v6e
topology: v6e:2x2x1
jax: 0.10.0
libtpu: 0.0.40
codegen_flags: <defaults>
</compile_context>

<pallas_src>
import functools

import jax
import jax.numpy as jnp
from jax import lax
from jax.experimental import pallas as pl
from jax.experimental.pallas import tpu as pltpu

_VMEM = pl.BlockSpec(memory_space=pltpu.MemorySpace.VMEM)
_SUBLANE = 8     # f32 sublane multiple
_LANE = 128      # lane width


def _round_up(x, m):
    return ((x + m - 1) // m) * m


# ----------------------------------------------------------------------------- kernel

def make_fused_kernel(T, B, HC):
    """Fused kernel: one-hot embedding + both LSTM towers (block-diagonal fused
    recurrence) + pair concat + MLP classifier + LogSoftmax, all resident in VMEM.

    T : padded sequence length (= max(T1, T2); the shorter tower is front-padded with
        -1 ids, which provably leaves its zero initial LSTM state untouched)
    B : padded batch
    HC: 2 * hidden_dim (concatenated hidden width)
    """
    SW = 2 * HC      # state register width: [junk (g*tanh(c)) | h_cat]
    GW = 4 * HC      # fused gate width:     [i_cat | f_cat | g_cat | o_cat]

    def kernel(ids1_ref, ids2_ref, table_ref, wbig_ref,
               w0_ref, b0_ref, wh_ref, bh_ref, wf_ref, bf_ref, out_ref):
        vc_pad = table_ref.shape[0]

        # Fused one-hot embedding lookup + input projection for BOTH towers, hoisted
        # out of the recurrence; tower-2 ids arrive pre-shifted into the second vocab
        # block, so one (T*B, Vc_pad) @ (Vc_pad, GW) matmul yields both towers' gates.
        # TODO(synk): one-hot matmul only makes sense for small vocabularies; switch to
        #             SMEM ids + HBM-table row DMA gather if the vocab ever grows.
        iota_v = lax.broadcasted_iota(jnp.int32, (T * B, vc_pad), 1)
        hit = (ids1_ref[...] == iota_v) | (ids2_ref[...] == iota_v)
        onehot = jnp.where(hit, 1.0, 0.0).astype(jnp.bfloat16)
        xw = jnp.dot(onehot, table_ref[...],
                     preferred_element_type=jnp.float32)            # (T*B, GW) f32

        wbig = wbig_ref[...]                                        # (SW, GW) bf16, rows[:HC]=0
        is_lo = lax.broadcasted_iota(jnp.int32, (B, SW), 1) < HC    # hoisted constant mask

        hg = jnp.zeros((B, SW), jnp.float32)      # [junk | h_cat]
        c_rep = jnp.zeros((B, SW), jnp.float32)   # [c_cat | c_cat] lane-replicated

        # TODO(synk): static full unroll is fine at T <= ~16; switch to
        #             lax.fori_loop(..., unroll=...) if T grows.
        for t in range(T):
            # ONE fused bf16 matmul per step; the junk lower half of hg multiplies the
            # zero rows of wbig, so the state never needs lane re-alignment.
            gates = xw[t * B:(t + 1) * B, :] + jnp.dot(
                hg.astype(jnp.bfloat16), wbig, preferred_element_type=jnp.float32)
            # 0.5 pre-scale is already folded into the i/f/o weight columns.
            sig_if = 0.5 * jnp.tanh(gates[:, :SW]) + 0.5            # [sig(i) | sig(f)]
            t_go = jnp.tanh(gates[:, SW:])                          # [tanh(g) | tanh(o/2)]
            act_go = jnp.where(is_lo, t_go, 0.5 * t_go + 0.5)       # [tanh(g) | sig(o)]
            gc = jnp.where(is_lo, act_go, c_rep)                    # [tanh(g) | c]
            prod = sig_if * gc                                      # [i*g | f*c]
            c_rep = prod + pltpu.roll(prod, shift=HC, axis=1)       # [c' | c']  (1 XLU roll)
            hg = act_go * jnp.tanh(c_rep)                           # [junk | h' = o*tanh(c')]

        # pair encoding: the fused layout gives concat([hn_1, hn_2]) for free.
        encoded = hg[:, HC:]                                        # (B, HC)

        # classifier: Linear+Tanh, n_layers x (Linear+Tanh), Linear, LogSoftmax.
        # Hidden/output widths are pre-padded to 128 lanes (zero weights / -1e30 bias),
        # so every matmul and the final store are lane-dense.
        h = jnp.tanh(jnp.dot(encoded, w0_ref[...],
                             preferred_element_type=jnp.float32) + b0_ref[...])
        for layer in range(wh_ref.shape[0]):   # static unroll over hidden layers
            h = jnp.tanh(jnp.dot(h, wh_ref[layer],
                                 preferred_element_type=jnp.float32) + bh_ref[layer])
        logits = (jnp.dot(h, wf_ref[...], preferred_element_type=jnp.float32)
                  + bf_ref[...])
        m = jnp.max(logits, axis=-1, keepdims=True)
        s = logits - m
        out_ref[...] = s - jnp.log(jnp.sum(jnp.exp(s), axis=-1, keepdims=True))

    return kernel


# ----------------------------------------------------------------------------- params

def init_params(key, vocab_1, vocab_2, embed_dim_1, embed_dim_2, hidden_dim,
                class_dim, class_hidden_dim, n_layers, n_classes):
    """Initialize in PyTorch layout / PyTorch-default distributions (f32 stand-in for f64)."""
    ks = jax.random.split(key, 12)

    def uniform(k, shape, bound):
        return jax.random.uniform(k, shape, jnp.float32, -bound, bound)

    inv_h = 1.0 / float(hidden_dim) ** 0.5
    inv_cd = 1.0 / float(class_dim) ** 0.5
    inv_ch = 1.0 / float(class_hidden_dim) ** 0.5
    return {
        # nn.Embedding default: N(0, 1)
        "emb1": jax.random.normal(ks[0], (vocab_1, embed_dim_1), jnp.float32),
        "emb2": jax.random.normal(ks[1], (vocab_2, embed_dim_2), jnp.float32),
        # nn.LSTM (bias=False): U(+-1/sqrt(H)); weight_ih: (4H, E), weight_hh: (4H, H)
        "w_ih_1": uniform(ks[2], (4 * hidden_dim, embed_dim_1), inv_h),
        "w_hh_1": uniform(ks[3], (4 * hidden_dim, hidden_dim), inv_h),
        "w_ih_2": uniform(ks[4], (4 * hidden_dim, embed_dim_2), inv_h),
        "w_hh_2": uniform(ks[5], (4 * hidden_dim, hidden_dim), inv_h),
        # classifier Linears, PyTorch (out, in) layout
        "w0": uniform(ks[6], (class_hidden_dim, class_dim), inv_cd),
        "b0": uniform(ks[7], (class_hidden_dim,), inv_cd),
        "wh": uniform(ks[8], (n_layers, class_hidden_dim, class_hidden_dim), inv_ch),
        "bh": uniform(ks[9], (n_layers, class_hidden_dim), inv_ch),
        "wf": uniform(ks[10], (n_classes, class_hidden_dim), inv_ch),
        "bf": uniform(ks[11], (n_classes,), inv_ch),
    }


def _split_gates(w):
    """PyTorch LSTM weight row blocks [i, f, g, o] -> 4 x (H, X)."""
    return jnp.split(w, 4, axis=0)


def prepare_kernel_params(params):
    """One-time conversion to kernel layout (no per-call cost).

    Builds:
      * fused block-diagonal (Vc_pad, 8H) bf16 input table = emb @ W_ih^T per tower,
        gate-interleaved [i1 i2 | f1 f2 | g1 g2 | o1 o2], 0.5 folded into i/f/o columns
      * fused block-diagonal (4H, 8H) bf16 hidden->hidden matrix whose first 2H rows are
        zero (they absorb the junk half of the state register)
      * classifier weights transposed + zero-padded to 128-lane-dense blocks
        (padded logit columns get a -1e30 bias so LogSoftmax is unchanged)
    """
    H = params["w_hh_1"].shape[1]
    HC = 2 * H
    v1 = params["emb1"].shape[0]
    v2 = params["emb2"].shape[0]
    vc_pad = _round_up(v1 + v2, _LANE)
    scales = (0.5, 0.5, 1.0, 0.5)          # sigmoid-via-tanh fold for i, f, o (not g)

    # --- fused input projection table (emb @ W_ih hoisted to prep time) ----------
    table = jnp.zeros((vc_pad, 4 * HC), jnp.float32)
    for tower, (emb, w_ih, row0) in enumerate(
            ((params["emb1"], params["w_ih_1"], 0),
             (params["emb2"], params["w_ih_2"], v1))):
        nrows = emb.shape[0]
        for g_idx, (w_g, sc) in enumerate(zip(_split_gates(w_ih), scales)):
            col0 = g_idx * HC + tower * H
            table = table.at[row0:row0 + nrows, col0:col0 + H].set(sc * (emb @ w_g.T))

    # --- fused block-diagonal hidden -> hidden ------------------------------------
    w_cat = jnp.zeros((HC, 4 * HC), jnp.float32)
    for tower, w_hh in enumerate((params["w_hh_1"], params["w_hh_2"])):
        for g_idx, (w_g, sc) in enumerate(zip(_split_gates(w_hh), scales)):
            r0 = tower * H
            col0 = g_idx * HC + tower * H
            w_cat = w_cat.at[r0:r0 + H, col0:col0 + H].set(sc * w_g.T)
    w_big = jnp.concatenate([jnp.zeros_like(w_cat), w_cat], axis=0)     # (4H, 8H)

    # --- classifier (padded lane-dense) --------------------------------------------
    ch = params["w0"].shape[0]
    cd = params["w0"].shape[1]
    nc = params["wf"].shape[0]
    nl = params["wh"].shape[0]
    chp = _round_up(ch, _LANE)
    ncp = _round_up(nc, _LANE)
    w0 = jnp.zeros((cd, chp), jnp.float32).at[:, :ch].set(params["w0"].T)
    b0 = jnp.zeros((1, chp), jnp.float32).at[:, :ch].set(params["b0"])
    wh = jnp.zeros((nl, chp, chp), jnp.float32).at[:, :ch, :ch].set(
        jnp.transpose(params["wh"], (0, 2, 1)))
    bh = jnp.zeros((nl, 1, chp), jnp.float32).at[:, 0, :ch].set(params["bh"])
    wf = jnp.zeros((chp, ncp), jnp.float32).at[:ch, :nc].set(params["wf"].T)
    bf = jnp.full((1, ncp), -1e30, jnp.float32).at[0, :nc].set(params["bf"])

    return {
        "table": table.astype(jnp.bfloat16),   # bf16 recurrence weights, f32 accumulate
        "w_big": w_big.astype(jnp.bfloat16),
        "w0": w0, "b0": b0, "wh": wh, "bh": bh, "wf": wf, "bf": bf,
    }


# ----------------------------------------------------------------------------- forward

@functools.partial(jax.jit, static_argnames=("vocab_1", "n_classes"))
def pair_classifier_forward(kparams, input_1, input_2, *, vocab_1, n_classes):
    """input_1: (B, T1) int ids; input_2: (B, T2) int ids -> (B, n_classes) log-probs."""
    B, T1 = input_1.shape
    _, T2 = input_2.shape
    T = max(T1, T2)
    B_pad = _round_up(B, _SUBLANE)
    HC = kparams["w_big"].shape[0] // 2

    def prep_ids(ids, offset):
        # Tower-2 ids are shifted into the second vocab block of the fused table.
        # Front/batch pads use -1 -> all-zero one-hot -> zero gate input, which leaves
        # the zero initial LSTM state exactly untouched (semantics preserved).
        ids = ids.astype(jnp.int32) + offset
        t_seq = ids.shape[1]
        ids = jnp.pad(ids, ((0, B_pad - B), (T - t_seq, 0)), constant_values=-1)
        return jnp.transpose(ids, (1, 0)).reshape(T * B_pad, 1)     # time-major, flat

    ids1 = prep_ids(input_1, 0)
    ids2 = prep_ids(input_2, vocab_1)

    out = pl.pallas_call(
        make_fused_kernel(T, B_pad, HC),
        out_shape=jax.ShapeDtypeStruct((B_pad, kparams["wf"].shape[1]), jnp.float32),
        in_specs=[_VMEM] * 10,
        out_specs=_VMEM,
        # Single program; everything resident in VMEM (<0.5 MiB) -> no grid needed.
        # TODO(synk): on v7x, split towers across the 2 TensorCores only if the
        #             block-diagonal fusion is ever dropped or T grows large.
    )(ids1, ids2, kparams["table"], kparams["w_big"],
      kparams["w0"], kparams["b0"], kparams["wh"], kparams["bh"],
      kparams["wf"], kparams["bf"])
    return out[:B, :n_classes]


# ----------------------------------------------------------------------------- reference

def reference_forward(params, input_1, input_2):
    """Pure-JAX (XLA) f32 reference of the PyTorch module, for validation."""
    def lstm_final(ids, emb, w_ih, w_hh):
        x = emb[ids]                                     # (B, T, E)
        Bs, Ts, _ = x.shape
        H = w_hh.shape[1]
        h = jnp.zeros((Bs, H), jnp.float32)
        c = jnp.zeros((Bs, H), jnp.float32)
        for t in range(Ts):
            z = x[:, t] @ w_ih.T + h @ w_hh.T            # (B, 4H), rows [i, f, g, o]
            i, f, g, o = jnp.split(z, 4, axis=1)
            i, f, o = jax.nn.sigmoid(i), jax.nn.sigmoid(f), jax.nn.sigmoid(o)
            g = jnp.tanh(g)
            c = f * c + i * g
            h = o * jnp.tanh(c)
        return h

    hn1 = lstm_final(input_1, params["emb1"], params["w_ih_1"], params["w_hh_1"])
    hn2 = lstm_final(input_2, params["emb2"], params["w_ih_2"], params["w_hh_2"])
    enc = jnp.concatenate([hn1, hn2], axis=-1)
    h = jnp.tanh(enc @ params["w0"].T + params["b0"])
    for layer in range(params["wh"].shape[0]):
        h = jnp.tanh(h @ params["wh"][layer].T + params["bh"][layer])
    logits = h @ params["wf"].T + params["bf"]
    return jax.nn.log_softmax(logits, axis=-1)


# ----------------------------------------------------------------------------- main

if __name__ == "__main__":
    B = 2
    T1, T2 = 8, 8
    VOCAB_1, VOCAB_2 = 20, 24
    EMBED_DIM_1, EMBED_DIM_2 = 16, 16
    HIDDEN_DIM = 32
    CLASS_DIM = 2 * HIDDEN_DIM          # [hn_1 ; hn_2]
    CLASS_HIDDEN_DIM = 32
    N_LAYERS = 1
    N_CLASSES = 4

    key = jax.random.PRNGKey(0)
    k_params, k_in1, k_in2 = jax.random.split(key, 3)

    params = init_params(k_params, VOCAB_1, VOCAB_2, EMBED_DIM_1, EMBED_DIM_2,
                         HIDDEN_DIM, CLASS_DIM, CLASS_HIDDEN_DIM, N_LAYERS,
                         N_CLASSES)
    kparams = prepare_kernel_params(params)     # one-time layout conversion

    input_1 = jax.random.randint(k_in1, (B, T1), 0, VOCAB_1, dtype=jnp.int32)
    input_2 = jax.random.randint(k_in2, (B, T2), 0, VOCAB_2, dtype=jnp.int32)

    log_probs = pair_classifier_forward(kparams, input_1, input_2,
                                        vocab_1=VOCAB_1, n_classes=N_CLASSES)
    jax.block_until_ready(log_probs)

    assert log_probs.shape == (B, N_CLASSES)
    # LogSoftmax rows must sum to 1 in probability space.
    assert bool(jnp.all(jnp.abs(jnp.sum(jnp.exp(log_probs), axis=-1) - 1.0) < 1e-4))
    # Cross-check vs. pure-JAX f32 reference (kernel recurrence weights are bf16,
    # hence the loose-ish tolerance).
    ref = reference_forward(params, input_1, input_2)
    assert bool(jnp.all(jnp.abs(log_probs - ref) < 3e-2)), (log_probs, ref)
    print("KERNEL_OK")
</pallas_src>

<mosaic_0001>
module attributes {stable_mosaic.version = 11 : i64} {
  func.func @kernel(%arg0: memref<64x1xi32, #tpu.memory_space<vmem>>, %arg1: memref<64x1xi32, #tpu.memory_space<vmem>>, %arg2: memref<128x256xbf16, #tpu.memory_space<vmem>>, %arg3: memref<128x256xbf16, #tpu.memory_space<vmem>>, %arg4: memref<64x128xf32, #tpu.memory_space<vmem>>, %arg5: memref<1x128xf32, #tpu.memory_space<vmem>>, %arg6: memref<1x128x128xf32, #tpu.memory_space<vmem>>, %arg7: memref<1x1x128xf32, #tpu.memory_space<vmem>>, %arg8: memref<128x128xf32, #tpu.memory_space<vmem>>, %arg9: memref<1x128xf32, #tpu.memory_space<vmem>>, %arg10: memref<8x128xf32, #tpu.memory_space<vmem>>) attributes {dimension_semantics = [], scalar_prefetch = 0 : i64, scratch_operands = 0 : i64, tpu.core_type = #tpu.core_type<tc>} {
    %0 = tpu.iota {dimensions = array<i32: 1>} : vector<64x128xi32>
    %c0 = arith.constant 0 : index
    %c0_0 = arith.constant 0 : index
    %1 = vector.load %arg0[%c0, %c0_0] : memref<64x1xi32, #tpu.memory_space<vmem>>, vector<64x1xi32>
    %2 = vector.broadcast %1 : vector<64x1xi32> to vector<64x128xi32>
    %3 = arith.cmpi eq, %2, %0 : vector<64x128xi32>
    %c0_1 = arith.constant 0 : index
    %c0_2 = arith.constant 0 : index
    %4 = vector.load %arg1[%c0_1, %c0_2] : memref<64x1xi32, #tpu.memory_space<vmem>>, vector<64x1xi32>
    %5 = vector.broadcast %4 : vector<64x1xi32> to vector<64x128xi32>
    %6 = arith.cmpi eq, %5, %0 : vector<64x128xi32>
    %7 = arith.ori %3, %6 : vector<64x128xi1>
    %cst = arith.constant 1.000000e+00 : f32
    %cst_3 = arith.constant 0.000000e+00 : f32
    %8 = vector.broadcast %cst : f32 to vector<64x128xf32>
    %9 = vector.broadcast %cst_3 : f32 to vector<64x128xf32>
    %10 = arith.select %7, %8, %9 : vector<64x128xi1>, vector<64x128xf32>
    %11 = arith.truncf %10 : vector<64x128xf32> to vector<64x128xbf16>
    %c0_4 = arith.constant 0 : index
    %c0_5 = arith.constant 0 : index
    %12 = vector.load %arg2[%c0_4, %c0_5] : memref<128x256xbf16, #tpu.memory_space<vmem>>, vector<128x256xbf16>
    %cst_6 = arith.constant dense<0.000000e+00> : vector<64x256xf32>
    %13 = tpu.matmul %11, %12, %cst_6 {dimension_numbers = #tpu.dot_dimension_numbers<[1], [0], [0], [1], [0, 0, 1, 1], [], []>} : vector<64x128xbf16>, vector<128x256xbf16>, vector<64x256xf32> -> vector<64x256xf32>
    %c0_7 = arith.constant 0 : index
    %c0_8 = arith.constant 0 : index
    %14 = vector.load %arg3[%c0_7, %c0_8] : memref<128x256xbf16, #tpu.memory_space<vmem>>, vector<128x256xbf16>
    %15 = tpu.iota {dimensions = array<i32: 1>} : vector<8x128xi32>
    %c64_i32 = arith.constant 64 : i32
    %16 = vector.broadcast %c64_i32 : i32 to vector<8x128xi32>
    %17 = arith.cmpi slt, %15, %16 : vector<8x128xi32>
    %cst_9 = arith.constant 0.000000e+00 : f32
    %18 = vector.broadcast %cst_9 : f32 to vector<8x128xf32>
    %cst_10 = arith.constant 0.000000e+00 : f32
    %19 = vector.broadcast %cst_10 : f32 to vector<8x128xf32>
    %20 = vector.extract_strided_slice %13 {offsets = [0, 0], sizes = [8, 256], strides = [1, 1]} : vector<64x256xf32> to vector<8x256xf32>
    %21 = arith.truncf %18 : vector<8x128xf32> to vector<8x128xbf16>
    %cst_11 = arith.constant dense<0.000000e+00> : vector<8x256xf32>
    %22 = tpu.matmul %21, %14, %cst_11 {dimension_numbers = #tpu.dot_dimension_numbers<[1], [0], [0], [1], [0, 0, 1, 1], [], []>} : vector<8x128xbf16>, vector<128x256xbf16>, vector<8x256xf32> -> vector<8x256xf32>
    %23 = arith.addf %20, %22 : vector<8x256xf32>
    %24 = vector.extract_strided_slice %23 {offsets = [0, 0], sizes = [8, 128], strides = [1, 1]} : vector<8x256xf32> to vector<8x128xf32>
    %25 = math.tanh %24 : vector<8x128xf32>
    %cst_12 = arith.constant 5.000000e-01 : f32
    %26 = vector.broadcast %cst_12 : f32 to vector<8x128xf32>
    %27 = arith.mulf %26, %25 : vector<8x128xf32>
    %cst_13 = arith.constant 5.000000e-01 : f32
    %28 = vector.broadcast %cst_13 : f32 to vector<8x128xf32>
    %29 = arith.addf %27, %28 : vector<8x128xf32>
    %30 = vector.extract_strided_slice %23 {offsets = [0, 128], sizes = [8, 128], strides = [1, 1]} : vector<8x256xf32> to vector<8x128xf32>
    %31 = math.tanh %30 : vector<8x128xf32>
    %cst_14 = arith.constant 5.000000e-01 : f32
    %32 = vector.broadcast %cst_14 : f32 to vector<8x128xf32>
    %33 = arith.mulf %32, %31 : vector<8x128xf32>
    %cst_15 = arith.constant 5.000000e-01 : f32
    %34 = vector.broadcast %cst_15 : f32 to vector<8x128xf32>
    %35 = arith.addf %33, %34 : vector<8x128xf32>
    %36 = arith.select %17, %31, %35 : vector<8x128xi1>, vector<8x128xf32>
    %37 = arith.select %17, %36, %19 : vector<8x128xi1>, vector<8x128xf32>
    %38 = arith.mulf %29, %37 : vector<8x128xf32>
    %c64_i32_16 = arith.constant 64 : i32
    %39 = tpu.dynamic_rotate %38 by %c64_i32_16 dim 1 : vector<8x128xf32>, i32 -> vector<8x128xf32>
    %40 = arith.addf %38, %39 : vector<8x128xf32>
    %41 = math.tanh %40 : vector<8x128xf32>
    %42 = arith.mulf %36, %41 : vector<8x128xf32>
    %43 = vector.extract_strided_slice %13 {offsets = [8, 0], sizes = [8, 256], strides = [1, 1]} : vector<64x256xf32> to vector<8x256xf32>
    %44 = arith.truncf %42 : vector<8x128xf32> to vector<8x128xbf16>
    %cst_17 = arith.constant dense<0.000000e+00> : vector<8x256xf32>
    %45 = tpu.matmul %44, %14, %cst_17 {dimension_numbers = #tpu.dot_dimension_numbers<[1], [0], [0], [1], [0, 0, 1, 1], [], []>} : vector<8x128xbf16>, vector<128x256xbf16>, vector<8x256xf32> -> vector<8x256xf32>
    %46 = arith.addf %43, %45 : vector<8x256xf32>
    %47 = vector.extract_strided_slice %46 {offsets = [0, 0], sizes = [8, 128], strides = [1, 1]} : vector<8x256xf32> to vector<8x128xf32>
    %48 = math.tanh %47 : vector<8x128xf32>
    %cst_18 = arith.constant 5.000000e-01 : f32
    %49 = vector.broadcast %cst_18 : f32 to vector<8x128xf32>
    %50 = arith.mulf %49, %48 : vector<8x128xf32>
    %cst_19 = arith.constant 5.000000e-01 : f32
    %51 = vector.broadcast %cst_19 : f32 to vector<8x128xf32>
    %52 = arith.addf %50, %51 : vector<8x128xf32>
    %53 = vector.extract_strided_slice %46 {offsets = [0, 128], sizes = [8, 128], strides = [1, 1]} : vector<8x256xf32> to vector<8x128xf32>
    %54 = math.tanh %53 : vector<8x128xf32>
    %cst_20 = arith.constant 5.000000e-01 : f32
    %55 = vector.broadcast %cst_20 : f32 to vector<8x128xf32>
    %56 = arith.mulf %55, %54 : vector<8x128xf32>
    %cst_21 = arith.constant 5.000000e-01 : f32
    %57 = vector.broadcast %cst_21 : f32 to vector<8x128xf32>
    %58 = arith.addf %56, %57 : vector<8x128xf32>
    %59 = arith.select %17, %54, %58 : vector<8x128xi1>, vector<8x128xf32>
    %60 = arith.select %17, %59, %40 : vector<8x128xi1>, vector<8x128xf32>
    %61 = arith.mulf %52, %60 : vector<8x128xf32>
    %c64_i32_22 = arith.constant 64 : i32
    %62 = tpu.dynamic_rotate %61 by %c64_i32_22 dim 1 : vector<8x128xf32>, i32 -> vector<8x128xf32>
    %63 = arith.addf %61, %62 : vector<8x128xf32>
    %64 = math.tanh %63 : vector<8x128xf32>
    %65 = arith.mulf %59, %64 : vector<8x128xf32>
    %66 = vector.extract_strided_slice %13 {offsets = [16, 0], sizes = [8, 256], strides = [1, 1]} : vector<64x256xf32> to vector<8x256xf32>
    %67 = arith.truncf %65 : vector<8x128xf32> to vector<8x128xbf16>
    %cst_23 = arith.constant dense<0.000000e+00> : vector<8x256xf32>
    %68 = tpu.matmul %67, %14, %cst_23 {dimension_numbers = #tpu.dot_dimension_numbers<[1], [0], [0], [1], [0, 0, 1, 1], [], []>} : vector<8x128xbf16>, vector<128x256xbf16>, vector<8x256xf32> -> vector<8x256xf32>
    %69 = arith.addf %66, %68 : vector<8x256xf32>
    %70 = vector.extract_strided_slice %69 {offsets = [0, 0], sizes = [8, 128], strides = [1, 1]} : vector<8x256xf32> to vector<8x128xf32>
    %71 = math.tanh %70 : vector<8x128xf32>
    %cst_24 = arith.constant 5.000000e-01 : f32
    %72 = vector.broadcast %cst_24 : f32 to vector<8x128xf32>
    %73 = arith.mulf %72, %71 : vector<8x128xf32>
    %cst_25 = arith.constant 5.000000e-01 : f32
    %74 = vector.broadcast %cst_25 : f32 to vector<8x128xf32>
    %75 = arith.addf %73, %74 : vector<8x128xf32>
    %76 = vector.extract_strided_slice %69 {offsets = [0, 128], sizes = [8, 128], strides = [1, 1]} : vector<8x256xf32> to vector<8x128xf32>
    %77 = math.tanh %76 : vector<8x128xf32>
    %cst_26 = arith.constant 5.000000e-01 : f32
    %78 = vector.broadcast %cst_26 : f32 to vector<8x128xf32>
    %79 = arith.mulf %78, %77 : vector<8x128xf32>
    %cst_27 = arith.constant 5.000000e-01 : f32
    %80 = vector.broadcast %cst_27 : f32 to vector<8x128xf32>
    %81 = arith.addf %79, %80 : vector<8x128xf32>
    %82 = arith.select %17, %77, %81 : vector<8x128xi1>, vector<8x128xf32>
    %83 = arith.select %17, %82, %63 : vector<8x128xi1>, vector<8x128xf32>
    %84 = arith.mulf %75, %83 : vector<8x128xf32>
    %c64_i32_28 = arith.constant 64 : i32
    %85 = tpu.dynamic_rotate %84 by %c64_i32_28 dim 1 : vector<8x128xf32>, i32 -> vector<8x128xf32>
    %86 = arith.addf %84, %85 : vector<8x128xf32>
    %87 = math.tanh %86 : vector<8x128xf32>
    %88 = arith.mulf %82, %87 : vector<8x128xf32>
    %89 = vector.extract_strided_slice %13 {offsets = [24, 0], sizes = [8, 256], strides = [1, 1]} : vector<64x256xf32> to vector<8x256xf32>
    %90 = arith.truncf %88 : vector<8x128xf32> to vector<8x128xbf16>
    %cst_29 = arith.constant dense<0.000000e+00> : vector<8x256xf32>
    %91 = tpu.matmul %90, %14, %cst_29 {dimension_numbers = #tpu.dot_dimension_numbers<[1], [0], [0], [1], [0, 0, 1, 1], [], []>} : vector<8x128xbf16>, vector<128x256xbf16>, vector<8x256xf32> -> vector<8x256xf32>
    %92 = arith.addf %89, %91 : vector<8x256xf32>
    %93 = vector.extract_strided_slice %92 {offsets = [0, 0], sizes = [8, 128], strides = [1, 1]} : vector<8x256xf32> to vector<8x128xf32>
    %94 = math.tanh %93 : vector<8x128xf32>
    %cst_30 = arith.constant 5.000000e-01 : f32
    %95 = vector.broadcast %cst_30 : f32 to vector<8x128xf32>
    %96 = arith.mulf %95, %94 : vector<8x128xf32>
    %cst_31 = arith.constant 5.000000e-01 : f32
    %97 = vector.broadcast %cst_31 : f32 to vector<8x128xf32>
    %98 = arith.addf %96, %97 : vector<8x128xf32>
    %99 = vector.extract_strided_slice %92 {offsets = [0, 128], sizes = [8, 128], strides = [1, 1]} : vector<8x256xf32> to vector<8x128xf32>
    %100 = math.tanh %99 : vector<8x128xf32>
    %cst_32 = arith.constant 5.000000e-01 : f32
    %101 = vector.broadcast %cst_32 : f32 to vector<8x128xf32>
    %102 = arith.mulf %101, %100 : vector<8x128xf32>
    %cst_33 = arith.constant 5.000000e-01 : f32
    %103 = vector.broadcast %cst_33 : f32 to vector<8x128xf32>
    %104 = arith.addf %102, %103 : vector<8x128xf32>
    %105 = arith.select %17, %100, %104 : vector<8x128xi1>, vector<8x128xf32>
    %106 = arith.select %17, %105, %86 : vector<8x128xi1>, vector<8x128xf32>
    %107 = arith.mulf %98, %106 : vector<8x128xf32>
    %c64_i32_34 = arith.constant 64 : i32
    %108 = tpu.dynamic_rotate %107 by %c64_i32_34 dim 1 : vector<8x128xf32>, i32 -> vector<8x128xf32>
    %109 = arith.addf %107, %108 : vector<8x128xf32>
    %110 = math.tanh %109 : vector<8x128xf32>
    %111 = arith.mulf %105, %110 : vector<8x128xf32>
    %112 = vector.extract_strided_slice %13 {offsets = [32, 0], sizes = [8, 256], strides = [1, 1]} : vector<64x256xf32> to vector<8x256xf32>
    %113 = arith.truncf %111 : vector<8x128xf32> to vector<8x128xbf16>
    %cst_35 = arith.constant dense<0.000000e+00> : vector<8x256xf32>
    %114 = tpu.matmul %113, %14, %cst_35 {dimension_numbers = #tpu.dot_dimension_numbers<[1], [0], [0], [1], [0, 0, 1, 1], [], []>} : vector<8x128xbf16>, vector<128x256xbf16>, vector<8x256xf32> -> vector<8x256xf32>
    %115 = arith.addf %112, %114 : vector<8x256xf32>
    %116 = vector.extract_strided_slice %115 {offsets = [0, 0], sizes = [8, 128], strides = [1, 1]} : vector<8x256xf32> to vector<8x128xf32>
    %117 = math.tanh %116 : vector<8x128xf32>
    %cst_36 = arith.constant 5.000000e-01 : f32
    %118 = vector.broadcast %cst_36 : f32 to vector<8x128xf32>
    %119 = arith.mulf %118, %117 : vector<8x128xf32>
    %cst_37 = arith.constant 5.000000e-01 : f32
    %120 = vector.broadcast %cst_37 : f32 to vector<8x128xf32>
    %121 = arith.addf %119, %120 : vector<8x128xf32>
    %122 = vector.extract_strided_slice %115 {offsets = [0, 128], sizes = [8, 128], strides = [1, 1]} : vector<8x256xf32> to vector<8x128xf32>
    %123 = math.tanh %122 : vector<8x128xf32>
    %cst_38 = arith.constant 5.000000e-01 : f32
    %124 = vector.broadcast %cst_38 : f32 to vector<8x128xf32>
    %125 = arith.mulf %124, %123 : vector<8x128xf32>
    %cst_39 = arith.constant 5.000000e-01 : f32
    %126 = vector.broadcast %cst_39 : f32 to vector<8x128xf32>
    %127 = arith.addf %125, %126 : vector<8x128xf32>
    %128 = arith.select %17, %123, %127 : vector<8x128xi1>, vector<8x128xf32>
    %129 = arith.select %17, %128, %109 : vector<8x128xi1>, vector<8x128xf32>
    %130 = arith.mulf %121, %129 : vector<8x128xf32>
    %c64_i32_40 = arith.constant 64 : i32
    %131 = tpu.dynamic_rotate %130 by %c64_i32_40 dim 1 : vector<8x128xf32>, i32 -> vector<8x128xf32>
    %132 = arith.addf %130, %131 : vector<8x128xf32>
    %133 = math.tanh %132 : vector<8x128xf32>
    %134 = arith.mulf %128, %133 : vector<8x128xf32>
    %135 = vector.extract_strided_slice %13 {offsets = [40, 0], sizes = [8, 256], strides = [1, 1]} : vector<64x256xf32> to vector<8x256xf32>
    %136 = arith.truncf %134 : vector<8x128xf32> to vector<8x128xbf16>
    %cst_41 = arith.constant dense<0.000000e+00> : vector<8x256xf32>
    %137 = tpu.matmul %136, %14, %cst_41 {dimension_numbers = #tpu.dot_dimension_numbers<[1], [0], [0], [1], [0, 0, 1, 1], [], []>} : vector<8x128xbf16>, vector<128x256xbf16>, vector<8x256xf32> -> vector<8x256xf32>
    %138 = arith.addf %135, %137 : vector<8x256xf32>
    %139 = vector.extract_strided_slice %138 {offsets = [0, 0], sizes = [8, 128], strides = [1, 1]} : vector<8x256xf32> to vector<8x128xf32>
    %140 = math.tanh %139 : vector<8x128xf32>
    %cst_42 = arith.constant 5.000000e-01 : f32
    %141 = vector.broadcast %cst_42 : f32 to vector<8x128xf32>
    %142 = arith.mulf %141, %140 : vector<8x128xf32>
    %cst_43 = arith.constant 5.000000e-01 : f32
    %143 = vector.broadcast %cst_43 : f32 to vector<8x128xf32>
    %144 = arith.addf %142, %143 : vector<8x128xf32>
    %145 = vector.extract_strided_slice %138 {offsets = [0, 128], sizes = [8, 128], strides = [1, 1]} : vector<8x256xf32> to vector<8x128xf32>
    %146 = math.tanh %145 : vector<8x128xf32>
    %cst_44 = arith.constant 5.000000e-01 : f32
    %147 = vector.broadcast %cst_44 : f32 to vector<8x128xf32>
    %148 = arith.mulf %147, %146 : vector<8x128xf32>
    %cst_45 = arith.constant 5.000000e-01 : f32
    %149 = vector.broadcast %cst_45 : f32 to vector<8x128xf32>
    %150 = arith.addf %148, %149 : vector<8x128xf32>
    %151 = arith.select %17, %146, %150 : vector<8x128xi1>, vector<8x128xf32>
    %152 = arith.select %17, %151, %132 : vector<8x128xi1>, vector<8x128xf32>
    %153 = arith.mulf %144, %152 : vector<8x128xf32>
    %c64_i32_46 = arith.constant 64 : i32
    %154 = tpu.dynamic_rotate %153 by %c64_i32_46 dim 1 : vector<8x128xf32>, i32 -> vector<8x128xf32>
    %155 = arith.addf %153, %154 : vector<8x128xf32>
    %156 = math.tanh %155 : vector<8x128xf32>
    %157 = arith.mulf %151, %156 : vector<8x128xf32>
    %158 = vector.extract_strided_slice %13 {offsets = [48, 0], sizes = [8, 256], strides = [1, 1]} : vector<64x256xf32> to vector<8x256xf32>
    %159 = arith.truncf %157 : vector<8x128xf32> to vector<8x128xbf16>
    %cst_47 = arith.constant dense<0.000000e+00> : vector<8x256xf32>
    %160 = tpu.matmul %159, %14, %cst_47 {dimension_numbers = #tpu.dot_dimension_numbers<[1], [0], [0], [1], [0, 0, 1, 1], [], []>} : vector<8x128xbf16>, vector<128x256xbf16>, vector<8x256xf32> -> vector<8x256xf32>
    %161 = arith.addf %158, %160 : vector<8x256xf32>
    %162 = vector.extract_strided_slice %161 {offsets = [0, 0], sizes = [8, 128], strides = [1, 1]} : vector<8x256xf32> to vector<8x128xf32>
    %163 = math.tanh %162 : vector<8x128xf32>
    %cst_48 = arith.constant 5.000000e-01 : f32
    %164 = vector.broadcast %cst_48 : f32 to vector<8x128xf32>
    %165 = arith.mulf %164, %163 : vector<8x128xf32>
    %cst_49 = arith.constant 5.000000e-01 : f32
    %166 = vector.broadcast %cst_49 : f32 to vector<8x128xf32>
    %167 = arith.addf %165, %166 : vector<8x128xf32>
    %168 = vector.extract_strided_slice %161 {offsets = [0, 128], sizes = [8, 128], strides = [1, 1]} : vector<8x256xf32> to vector<8x128xf32>
    %169 = math.tanh %168 : vector<8x128xf32>
    %cst_50 = arith.constant 5.000000e-01 : f32
    %170 = vector.broadcast %cst_50 : f32 to vector<8x128xf32>
    %171 = arith.mulf %170, %169 : vector<8x128xf32>
    %cst_51 = arith.constant 5.000000e-01 : f32
    %172 = vector.broadcast %cst_51 : f32 to vector<8x128xf32>
    %173 = arith.addf %171, %172 : vector<8x128xf32>
    %174 = arith.select %17, %169, %173 : vector<8x128xi1>, vector<8x128xf32>
    %175 = arith.select %17, %174, %155 : vector<8x128xi1>, vector<8x128xf32>
    %176 = arith.mulf %167, %175 : vector<8x128xf32>
    %c64_i32_52 = arith.constant 64 : i32
    %177 = tpu.dynamic_rotate %176 by %c64_i32_52 dim 1 : vector<8x128xf32>, i32 -> vector<8x128xf32>
    %178 = arith.addf %176, %177 : vector<8x128xf32>
    %179 = math.tanh %178 : vector<8x128xf32>
    %180 = arith.mulf %174, %179 : vector<8x128xf32>
    %181 = vector.extract_strided_slice %13 {offsets = [56, 0], sizes = [8, 256], strides = [1, 1]} : vector<64x256xf32> to vector<8x256xf32>
    %182 = arith.truncf %180 : vector<8x128xf32> to vector<8x128xbf16>
    %cst_53 = arith.constant dense<0.000000e+00> : vector<8x256xf32>
    %183 = tpu.matmul %182, %14, %cst_53 {dimension_numbers = #tpu.dot_dimension_numbers<[1], [0], [0], [1], [0, 0, 1, 1], [], []>} : vector<8x128xbf16>, vector<128x256xbf16>, vector<8x256xf32> -> vector<8x256xf32>
    %184 = arith.addf %181, %183 : vector<8x256xf32>
    %185 = vector.extract_strided_slice %184 {offsets = [0, 0], sizes = [8, 128], strides = [1, 1]} : vector<8x256xf32> to vector<8x128xf32>
    %186 = math.tanh %185 : vector<8x128xf32>
    %cst_54 = arith.constant 5.000000e-01 : f32
    %187 = vector.broadcast %cst_54 : f32 to vector<8x128xf32>
    %188 = arith.mulf %187, %186 : vector<8x128xf32>
    %cst_55 = arith.constant 5.000000e-01 : f32
    %189 = vector.broadcast %cst_55 : f32 to vector<8x128xf32>
    %190 = arith.addf %188, %189 : vector<8x128xf32>
    %191 = vector.extract_strided_slice %184 {offsets = [0, 128], sizes = [8, 128], strides = [1, 1]} : vector<8x256xf32> to vector<8x128xf32>
    %192 = math.tanh %191 : vector<8x128xf32>
    %cst_56 = arith.constant 5.000000e-01 : f32
    %193 = vector.broadcast %cst_56 : f32 to vector<8x128xf32>
    %194 = arith.mulf %193, %192 : vector<8x128xf32>
    %cst_57 = arith.constant 5.000000e-01 : f32
    %195 = vector.broadcast %cst_57 : f32 to vector<8x128xf32>
    %196 = arith.addf %194, %195 : vector<8x128xf32>
    %197 = arith.select %17, %192, %196 : vector<8x128xi1>, vector<8x128xf32>
    %198 = arith.select %17, %197, %178 : vector<8x128xi1>, vector<8x128xf32>
    %199 = arith.mulf %190, %198 : vector<8x128xf32>
    %c64_i32_58 = arith.constant 64 : i32
    %200 = tpu.dynamic_rotate %199 by %c64_i32_58 dim 1 : vector<8x128xf32>, i32 -> vector<8x128xf32>
    %201 = arith.addf %199, %200 : vector<8x128xf32>
    %202 = math.tanh %201 : vector<8x128xf32>
    %203 = arith.mulf %197, %202 : vector<8x128xf32>
    %204 = vector.extract_strided_slice %203 {offsets = [0, 64], sizes = [8, 64], strides = [1, 1]} : vector<8x128xf32> to vector<8x64xf32>
    %c0_59 = arith.constant 0 : index
    %c0_60 = arith.constant 0 : index
    %205 = vector.load %arg4[%c0_59, %c0_60] : memref<64x128xf32, #tpu.memory_space<vmem>>, vector<64x128xf32>
    %cst_61 = arith.constant dense<0.000000e+00> : vector<8x128xf32>
    %206 = tpu.matmul %204, %205, %cst_61 {dimension_numbers = #tpu.dot_dimension_numbers<[1], [0], [0], [1], [0, 0, 1, 1], [], []>} : vector<8x64xf32>, vector<64x128xf32>, vector<8x128xf32> -> vector<8x128xf32>
    %c0_62 = arith.constant 0 : index
    %c0_63 = arith.constant 0 : index
    %207 = vector.load %arg5[%c0_62, %c0_63] : memref<1x128xf32, #tpu.memory_space<vmem>>, vector<1x128xf32>
    %208 = vector.broadcast %207 : vector<1x128xf32> to vector<8x128xf32>
    %209 = arith.addf %206, %208 : vector<8x128xf32>
    %210 = math.tanh %209 : vector<8x128xf32>
    %c0_64 = arith.constant 0 : index
    %c0_65 = arith.constant 0 : index
    %c0_66 = arith.constant 0 : index
    %211 = vector.load %arg6[%c0_64, %c0_65, %c0_66] : memref<1x128x128xf32, #tpu.memory_space<vmem>>, vector<1x128x128xf32>
    %212 = vector.shape_cast %211 : vector<1x128x128xf32> to vector<128x128xf32>
    %cst_67 = arith.constant dense<0.000000e+00> : vector<8x128xf32>
    %213 = tpu.matmul %210, %212, %cst_67 {dimension_numbers = #tpu.dot_dimension_numbers<[1], [0], [0], [1], [0, 0, 1, 1], [], []>} : vector<8x128xf32>, vector<128x128xf32>, vector<8x128xf32> -> vector<8x128xf32>
    %c0_68 = arith.constant 0 : index
    %c0_69 = arith.constant 0 : index
    %c0_70 = arith.constant 0 : index
    %214 = vector.load %arg7[%c0_68, %c0_69, %c0_70] : memref<1x1x128xf32, #tpu.memory_space<vmem>>, vector<1x1x128xf32>
    %215 = vector.shape_cast %214 : vector<1x1x128xf32> to vector<1x128xf32>
    %216 = vector.broadcast %215 : vector<1x128xf32> to vector<8x128xf32>
    %217 = arith.addf %213, %216 : vector<8x128xf32>
    %218 = math.tanh %217 : vector<8x128xf32>
    %c0_71 = arith.constant 0 : index
    %c0_72 = arith.constant 0 : index
    %219 = vector.load %arg8[%c0_71, %c0_72] : memref<128x128xf32, #tpu.memory_space<vmem>>, vector<128x128xf32>
    %cst_73 = arith.constant dense<0.000000e+00> : vector<8x128xf32>
    %220 = tpu.matmul %218, %219, %cst_73 {dimension_numbers = #tpu.dot_dimension_numbers<[1], [0], [0], [1], [0, 0, 1, 1], [], []>} : vector<8x128xf32>, vector<128x128xf32>, vector<8x128xf32> -> vector<8x128xf32>
    %c0_74 = arith.constant 0 : index
    %c0_75 = arith.constant 0 : index
    %221 = vector.load %arg9[%c0_74, %c0_75] : memref<1x128xf32, #tpu.memory_space<vmem>>, vector<1x128xf32>
    %222 = vector.broadcast %221 : vector<1x128xf32> to vector<8x128xf32>
    %223 = arith.addf %220, %222 : vector<8x128xf32>
    %cst_76 = arith.constant dense<0xFF800000> : vector<8xf32>
    %224 = vector.multi_reduction <maximumf>, %223, %cst_76 [1] : vector<8x128xf32> to vector<8xf32>
    %225 = vector.shape_cast %224 : vector<8xf32> to vector<8x1xf32>
    %226 = vector.broadcast %225 : vector<8x1xf32> to vector<8x128xf32>
    %227 = arith.subf %223, %226 : vector<8x128xf32>
    %228 = math.exp %227 : vector<8x128xf32>
    %cst_77 = arith.constant dense<0.000000e+00> : vector<8xf32>
    %229 = vector.multi_reduction <add>, %228, %cst_77 [1] : vector<8x128xf32> to vector<8xf32>
    %230 = vector.shape_cast %229 : vector<8xf32> to vector<8x1xf32>
    %231 = math.log %230 : vector<8x1xf32>
    %232 = vector.broadcast %231 : vector<8x1xf32> to vector<8x128xf32>
    %233 = arith.subf %227, %232 : vector<8x128xf32>
    %c0_78 = arith.constant 0 : index
    %c0_79 = arith.constant 0 : index
    %234 = vector.load %arg10[%c0_78, %c0_79] : memref<8x128xf32, #tpu.memory_space<vmem>>, vector<8x128xf32>
    tpu.vector_store %arg10[%c0_78, %c0_79], %233 {strides = array<i32>} : memref<8x128xf32, #tpu.memory_space<vmem>>, vector<8x128xf32>,
    return
  }
}

</mosaic_0001>

<llo_original>
// kernel: pair_classifier_forward.1
$region0: #{pair_classifier_forward.1}
  #allocation0 [shape = 'u32[]', space=smem, size = 0x4, offset = 0x4, fixed_abs, tag = 'smem constant byte address 0x4 - core index']
  #allocation1 [shape = 'u32[144,128]{1,0:T(1,128)}', space=vmem, size = 0x12000, scoped, tag = 'internal scratch']
  %s0 = inlined_call_operand.vmem [shape: s32[64,1], index: 0, kind: input, shape index: {}]
  %s1 = inlined_call_operand.vmem [shape: s32[64,1], index: 1, kind: input, shape index: {}]
  %s2 = inlined_call_operand.vmem [shape: bf16[128,256], index: 2, kind: input, shape index: {}]
  %s3 = inlined_call_operand.hbm [shape: bf16[128,256], index: 3, kind: input, shape index: {}]
  %s4 = inlined_call_operand.vmem [shape: f32[64,128], index: 4, kind: input, shape index: {}]
  %s5 = inlined_call_operand.vmem [shape: f32[1,128], index: 5, kind: input, shape index: {}]
  %s6 = inlined_call_operand.hbm [shape: f32[1,128,128], index: 6, kind: input, shape index: {}]
  %s7 = inlined_call_operand.vmem [shape: f32[1,1,128], index: 7, kind: input, shape index: {}]
  %s8 = inlined_call_operand.hbm [shape: f32[128,128], index: 8, kind: input, shape index: {}]
  %s9 = inlined_call_operand.vmem [shape: f32[1,128], index: 9, kind: input, shape index: {}]
  %s10 = inlined_call_operand.vmem [shape: f32[8,128], index: 10, kind: output, shape index: {}]
  %s11 = sld [smem:[#allocation0]]
  $region62: #{pair_classifier_forward.1} parent=0
    _
  %s13 = ssub.s32 1, %s11
  %s14 = scalar_select 0, %s13, %s11
  $region1: #{pair_classifier_forward.1} parent=0
    #allocation2 [shape = 'u8[65536]{0}', space=vmem, size = 0x10000, scoped, tag = 'input window, operand 3, single buffered']
    #allocation3 [shape = 's32[1]{0}', space=sflag, size = 0x4, scoped, tag = 'scoped memory for pair_classifier_forward.1']
    #allocation4 [shape = 'u8[65536]{0}', space=vmem, size = 0x10000, scoped, tag = 'input window, operand 6, single buffered']
    #allocation5 [shape = 's32[1]{0}', space=sflag, size = 0x4, scoped, tag = 'scoped memory for pair_classifier_forward.1']
    #allocation6 [shape = 'u8[65536]{0}', space=vmem, size = 0x10000, scoped, tag = 'input window, operand 8, single buffered']
    %15 = vsyncpa [#allocation3], 0
    %16 = vsyncpa [#allocation5], 0
    // Predicated region
    $region2: #{pair_classifier_forward.1} parent=1 // pred_check
      _
    $region3: #{pair_classifier_forward.1} parent=1 // pred_check_branch
      %18 = sbr.rel (0) target = $region5
    $region4: #{pair_classifier_forward.1} parent=1 // pred_region
      _
    $region5: #{pair_classifier_forward.1} parent=1 // pred_fallthru
      _
    // Predicated region
    $region6: #{pair_classifier_forward.1} parent=1 // pred_check
      _
    $region7: #{pair_classifier_forward.1} parent=1 // pred_check_branch
      %20 = sbr.rel (0) target = $region9
    $region8: #{pair_classifier_forward.1} parent=1 // pred_region
      _
    $region9: #{pair_classifier_forward.1} parent=1 // pred_fallthru
      _
    // Predicated region
    $region10: #{pair_classifier_forward.1} parent=1 // pred_check
      _
    $region11: #{pair_classifier_forward.1} parent=1 // pred_check_branch
      %22 = sbr.rel (0) target = $region13
    $region12: #{pair_classifier_forward.1} parent=1 // pred_region
      _
    $region13: #{pair_classifier_forward.1} parent=1 // pred_fallthru
      _
    // Predicated region
    $region14: #{pair_classifier_forward.1} parent=1 // pred_check
      _
    $region15: #{pair_classifier_forward.1} parent=1 // pred_check_branch
      %24 = sbr.rel (0) target = $region17
    $region16: #{pair_classifier_forward.1} parent=1 // pred_region
      %s26 = ssub.s32 2048, 2048
      %27 = vsyncadd [#allocation3], %s26
      %s28 = sshll.u32 [#allocation2], 4
      %s29 = int_to_ptr.vmem [resolvable:$true] %s28
      %34 = dma.hbm_to_vmem [thread:$0]  %s3, 2048, %s29, [#allocation3], 128, 128, 8
    $region17: #{pair_classifier_forward.1} parent=1 // pred_fallthru
      _
    // Predicated region
    $region18: #{pair_classifier_forward.1} parent=1 // pred_check
      _
    $region19: #{pair_classifier_forward.1} parent=1 // pred_check_branch
      %36 = sbr.rel (0) target = $region21
    $region20: #{pair_classifier_forward.1} parent=1 // pred_region
      _
    $region21: #{pair_classifier_forward.1} parent=1 // pred_fallthru
      _
    // Predicated region
    $region22: #{pair_classifier_forward.1} parent=1 // pred_check
      _
    $region23: #{pair_classifier_forward.1} parent=1 // pred_check_branch
      %38 = sbr.rel (0) target = $region25
    $region24: #{pair_classifier_forward.1} parent=1 // pred_region
      _
    $region25: #{pair_classifier_forward.1} parent=1 // pred_fallthru
      _
    // Predicated region
    $region26: #{pair_classifier_forward.1} parent=1 // pred_check
      _
    $region27: #{pair_classifier_forward.1} parent=1 // pred_check_branch
      %40 = sbr.rel (0) target = $region29
    $region28: #{pair_classifier_forward.1} parent=1 // pred_region
      %s42 = ssub.s32 2048, 2048
      %43 = vsyncadd [#allocation5], %s42
      %s44 = sshll.u32 [#allocation4], 4
      %s45 = int_to_ptr.vmem [resolvable:$true] %s44
      %50 = dma.hbm_to_vmem [thread:$0]  %s6, 2048, %s45, [#allocation5], 128, 128, 8
    $region29: #{pair_classifier_forward.1} parent=1 // pred_fallthru
      _
    // Predicated region
    $region30: #{pair_classifier_forward.1} parent=1 // pred_check
      _
    $region31: #{pair_classifier_forward.1} parent=1 // pred_check_branch
      %52 = sbr.rel (0) target = $region33
    $region32: #{pair_classifier_forward.1} parent=1 // pred_region
      _
    $region33: #{pair_classifier_forward.1} parent=1 // pred_fallthru
      _
    // Predicated region
    $region34: #{pair_classifier_forward.1} parent=1 // pred_check
      _
    $region35: #{pair_classifier_forward.1} parent=1 // pred_check_branch
      %54 = sbr.rel (0) target = $region37
    $region36: #{pair_classifier_forward.1} parent=1 // pred_region
      %s56 = ssub.s32 2048, 2048
      %57 = vsyncadd [#allocation5], %s56
      %s58 = sshll.u32 [#allocation6], 4
      %s59 = int_to_ptr.vmem [resolvable:$true] %s58
      %64 = dma.hbm_to_vmem [thread:$0]  %s8, 2048, %s59, [#allocation5], 128, 128, 8
    $region37: #{pair_classifier_forward.1} parent=1 // pred_fallthru
      _
    // Predicated region
    $region38: #{pair_classifier_forward.1} parent=1 // pred_check
      _
    $region39: #{pair_classifier_forward.1} parent=1 // pred_check_branch
      %66 = sbr.rel (0) target = $region41
    $region40: #{pair_classifier_forward.1} parent=1 // pred_region
      _
    $region41: #{pair_classifier_forward.1} parent=1 // pred_fallthru
      _
    // Predicated region
    $region42: #{pair_classifier_forward.1} parent=1 // pred_check
      _
    $region43: #{pair_classifier_forward.1} parent=1 // pred_check_branch
      %68 = sbr.rel (0) target = $region45
    $region44: #{pair_classifier_forward.1} parent=1 // pred_region
      %69 = dma.done [#allocation3], 2048
    $region45: #{pair_classifier_forward.1} parent=1 // pred_fallthru
      _
    // Predicated region
    $region46: #{pair_classifier_forward.1} parent=1 // pred_check
      _
    $region47: #{pair_classifier_forward.1} parent=1 // pred_check_branch
      %71 = sbr.rel (0) target = $region49
    $region48: #{pair_classifier_forward.1} parent=1 // pred_region
      %72 = dma.done [#allocation5], 2048
    $region49: #{pair_classifier_forward.1} parent=1 // pred_fallthru
      _
    // Predicated region
    $region50: #{pair_classifier_forward.1} parent=1 // pred_check
      _
    $region51: #{pair_classifier_forward.1} parent=1 // pred_check_branch
      %74 = sbr.rel (0) target = $region53
    $region52: #{pair_classifier_forward.1} parent=1 // pred_region
      %75 = dma.done [#allocation5], 2048
    $region53: #{pair_classifier_forward.1} parent=1 // pred_fallthru
      _
    %v77 = vlaneseq
    %v78 = vand.u32 %v77, 127
    %v79 = vld [vmem:[%s0] sm:$0xff]
    %v80 = vld [vmem:[%s0 + $0x8] sm:$0xff]
    %v81 = vld [vmem:[%s0 + $0x10] sm:$0xff]
    %v82 = vld [vmem:[%s0 + $0x18] sm:$0xff]
    %v83 = vld [vmem:[%s0 + $0x20] sm:$0xff]
    %v84 = vld [vmem:[%s0 + $0x28] sm:$0xff]
    %v85 = vld [vmem:[%s0 + $0x30] sm:$0xff]
    %v86 = vld [vmem:[%s0 + $0x38] sm:$0xff]
    %87 = vset.pattern.permute.xlu0 0
    %88 = vperm.xlu0 %87, %v79
    %v89 = vpop.permute.xlu0 %88
    %90 = vset.pattern.permute.xlu0 0
    %91 = vperm.xlu0 %90, %v80
    %v92 = vpop.permute.xlu0 %91
    %93 = vset.pattern.permute.xlu0 0
    %94 = vperm.xlu0 %93, %v81
    %v95 = vpop.permute.xlu0 %94
    %96 = vset.pattern.permute.xlu0 0
    %97 = vperm.xlu0 %96, %v82
    %v98 = vpop.permute.xlu0 %97
    %99 = vset.pattern.permute.xlu0 0
    %100 = vperm.xlu0 %99, %v83
    %v101 = vpop.permute.xlu0 %100
    %102 = vset.pattern.permute.xlu0 0
    %103 = vperm.xlu0 %102, %v84
    %v104 = vpop.permute.xlu0 %103
    %105 = vset.pattern.permute.xlu0 0
    %106 = vperm.xlu0 %105, %v85
    %v107 = vpop.permute.xlu0 %106
    %108 = vset.pattern.permute.xlu0 0
    %109 = vperm.xlu0 %108, %v86
    %v110 = vpop.permute.xlu0 %109
    %vm111 = vcmp.eq.s32.totalorder %v89, %v78
    %vm112 = vcmp.eq.s32.totalorder %v92, %v78
    %vm113 = vcmp.eq.s32.totalorder %v95, %v78
    %vm114 = vcmp.eq.s32.totalorder %v98, %v78
    %vm115 = vcmp.eq.s32.totalorder %v101, %v78
    %vm116 = vcmp.eq.s32.totalorder %v104, %v78
    %vm117 = vcmp.eq.s32.totalorder %v107, %v78
    %vm118 = vcmp.eq.s32.totalorder %v110, %v78
    %v119 = vld [vmem:[%s1] sm:$0xff]
    %v120 = vld [vmem:[%s1 + $0x8] sm:$0xff]
    %v121 = vld [vmem:[%s1 + $0x10] sm:$0xff]
    %v122 = vld [vmem:[%s1 + $0x18] sm:$0xff]
    %v123 = vld [vmem:[%s1 + $0x20] sm:$0xff]
    %v124 = vld [vmem:[%s1 + $0x28] sm:$0xff]
    %v125 = vld [vmem:[%s1 + $0x30] sm:$0xff]
    %v126 = vld [vmem:[%s1 + $0x38] sm:$0xff]
    %127 = vset.pattern.permute.xlu0 0
    %128 = vperm.xlu0 %127, %v119
    %v129 = vpop.permute.xlu0 %128
    %130 = vset.pattern.permute.xlu0 0
    %131 = vperm.xlu0 %130, %v120
    %v132 = vpop.permute.xlu0 %131
    %133 = vset.pattern.permute.xlu0 0
    %134 = vperm.xlu0 %133, %v121
    %v135 = vpop.permute.xlu0 %134
    %136 = vset.pattern.permute.xlu0 0
    %137 = vperm.xlu0 %136, %v122
    %v138 = vpop.permute.xlu0 %137
    %139 = vset.pattern.permute.xlu0 0
    %140 = vperm.xlu0 %139, %v123
    %v141 = vpop.permute.xlu0 %140
    %142 = vset.pattern.permute.xlu0 0
    %143 = vperm.xlu0 %142, %v124
    %v144 = vpop.permute.xlu0 %143
    %145 = vset.pattern.permute.xlu0 0
    %146 = vperm.xlu0 %145, %v125
    %v147 = vpop.permute.xlu0 %146
    %148 = vset.pattern.permute.xlu0 0
    %149 = vperm.xlu0 %148, %v126
    %v150 = vpop.permute.xlu0 %149
    %vm151 = vcmp.eq.s32.totalorder %v129, %v78
    %vm152 = vcmp.eq.s32.totalorder %v132, %v78
    %vm153 = vcmp.eq.s32.totalorder %v135, %v78
    %vm154 = vcmp.eq.s32.totalorder %v138, %v78
    %vm155 = vcmp.eq.s32.totalorder %v141, %v78
    %vm156 = vcmp.eq.s32.totalorder %v144, %v78
    %vm157 = vcmp.eq.s32.totalorder %v147, %v78
    %vm158 = vcmp.eq.s32.totalorder %v150, %v78
    %vm159 = vmor %vm111, %vm151
    %vm160 = vmor %vm112, %vm152
    %vm161 = vmor %vm113, %vm153
    %vm162 = vmor %vm114, %vm154
    %vm163 = vmor %vm115, %vm155
    %vm164 = vmor %vm116, %vm156
    %vm165 = vmor %vm117, %vm157
    %vm166 = vmor %vm118, %vm158
    %v167 = vsel %vm159, 1.0, 0.0
    %v168 = vsel %vm160, 1.0, 0.0
    %v169 = vsel %vm161, 1.0, 0.0
    %v170 = vsel %vm162, 1.0, 0.0
    %v171 = vsel %vm163, 1.0, 0.0
    %v172 = vsel %vm164, 1.0, 0.0
    %v173 = vsel %vm165, 1.0, 0.0
    %v174 = vsel %vm166, 1.0, 0.0
    %v175 = vpack.c.bf16 %v168, %v167
    %v176 = vpack.c.bf16 %v170, %v169
    %v177 = vpack.c.bf16 %v172, %v171
    %v178 = vpack.c.bf16 %v174, %v173
    %v179 = vld [vmem:[%s2] sm:$0xff]
    %v180 = vld [vmem:[%s2 + $0x8] sm:$0xff]
    %v181 = vld [vmem:[%s2 + $0x10] sm:$0xff]
    %v182 = vld [vmem:[%s2 + $0x18] sm:$0xff]
    %v183 = vld [vmem:[%s2 + $0x20] sm:$0xff]
    %v184 = vld [vmem:[%s2 + $0x28] sm:$0xff]
    %v185 = vld [vmem:[%s2 + $0x30] sm:$0xff]
    %v186 = vld [vmem:[%s2 + $0x38] sm:$0xff]
    %v187 = vld [vmem:[%s2 + $0x40] sm:$0xff]
    %v188 = vld [vmem:[%s2 + $0x48] sm:$0xff]
    %v189 = vld [vmem:[%s2 + $0x50] sm:$0xff]
    %v190 = vld [vmem:[%s2 + $0x58] sm:$0xff]
    %v191 = vld [vmem:[%s2 + $0x60] sm:$0xff]
    %v192 = vld [vmem:[%s2 + $0x68] sm:$0xff]
    %v193 = vld [vmem:[%s2 + $0x70] sm:$0xff]
    %v194 = vld [vmem:[%s2 + $0x78] sm:$0xff]
    %v211 = vunpack.c.l.b16 %v179
    %v212 = vunpack.c.h.b16 %v179
    %v213 = vunpack.c.l.b16 %v180
    %v214 = vunpack.c.h.b16 %v180
    %v215 = vunpack.c.l.b16 %v181
    %v216 = vunpack.c.h.b16 %v181
    %v217 = vunpack.c.l.b16 %v182
    %v218 = vunpack.c.h.b16 %v182
    %v219 = vunpack.c.l.b16 %v183
    %v220 = vunpack.c.h.b16 %v183
    %v221 = vunpack.c.l.b16 %v184
    %v222 = vunpack.c.h.b16 %v184
    %v223 = vunpack.c.l.b16 %v185
    %v224 = vunpack.c.h.b16 %v185
    %v225 = vunpack.c.l.b16 %v186
    %v226 = vunpack.c.h.b16 %v186
    %v227 = vunpack.c.l.b16 %v187
    %v228 = vunpack.c.h.b16 %v187
    %v229 = vunpack.c.l.b16 %v188
    %v230 = vunpack.c.h.b16 %v188
    %v231 = vunpack.c.l.b16 %v189
    %v232 = vunpack.c.h.b16 %v189
    %v233 = vunpack.c.l.b16 %v190
    %v234 = vunpack.c.h.b16 %v190
    %v235 = vunpack.c.l.b16 %v191
    %v236 = vunpack.c.h.b16 %v191
    %v237 = vunpack.c.l.b16 %v192
    %v238 = vunpack.c.h.b16 %v192
    %v239 = vunpack.c.l.b16 %v193
    %v240 = vunpack.c.h.b16 %v193
    %v241 = vunpack.c.l.b16 %v194
    %v242 = vunpack.c.h.b16 %v194
    %v243 = vpack.c.b16 %v213, %v211
    %v244 = vpack.c.b16 %v214, %v212
    %v245 = vpack.c.b16 %v217, %v215
    %v246 = vpack.c.b16 %v218, %v216
    %v247 = vpack.c.b16 %v221, %v219
    %v248 = vpack.c.b16 %v222, %v220
    %v249 = vpack.c.b16 %v225, %v223
    %v250 = vpack.c.b16 %v226, %v224
    %v251 = vpack.c.b16 %v229, %v227
    %v252 = vpack.c.b16 %v230, %v228
    %v253 = vpack.c.b16 %v233, %v231
    %v254 = vpack.c.b16 %v234, %v232
    %v255 = vpack.c.b16 %v237, %v235
    %v256 = vpack.c.b16 %v238, %v236
    %v257 = vpack.c.b16 %v241, %v239
    %v258 = vpack.c.b16 %v242, %v240
    %275 = vmatprep.subr.bf16.mxu0 %v258
    %276 = vmatpush1.bf16.msra.mxu0 %v257
    %277 = vmatprep.subr.bf16.mxu0 %v256
    %278 = vmatpush1.bf16.msra.mxu0 %v255
    %279 = vmatprep.subr.bf16.mxu0 %v254
    %280 = vmatpush1.bf16.msra.mxu0 %v253
    %281 = vmatprep.subr.bf16.mxu0 %v252
    %282 = vmatpush1.bf16.msra.mxu0 %v251
    %283 = vmatprep.subr.bf16.mxu0 %v250
    %284 = vmatpush1.bf16.msra.mxu0 %v249
    %285 = vmatprep.subr.bf16.mxu0 %v248
    %286 = vmatpush1.bf16.msra.mxu0 %v247
    %287 = vmatprep.subr.bf16.mxu0 %v246
    %288 = vmatpush1.bf16.msra.mxu0 %v245
    %289 = vmatprep.subr.bf16.mxu0 %v244
    %290 = vmatpush1.bf16.msra.mxu0 %v243
    %291 = vmatprep.subr.bf16.mxu0 0
    %292 = vmatpush2.bf16.msra.mxu0 0
    %293 = vmatprep.subr.bf16.mxu0 0
    %294 = vmatpush2.bf16.msra.mxu0 0
    %295 = vmatprep.subr.bf16.mxu0 0
    %296 = vmatpush2.bf16.msra.mxu0 0
    %297 = vmatprep.subr.bf16.mxu0 0
    %298 = vmatpush2.bf16.msra.mxu0 0
    %299 = vmatprep.subr.bf16.mxu0 0
    %300 = vmatpush2.bf16.msra.mxu0 0
    %301 = vmatprep.subr.bf16.mxu0 0
    %302 = vmatpush2.bf16.msra.mxu0 0
    %303 = vmatprep.subr.bf16.mxu0 0
    %304 = vmatpush2.bf16.msra.mxu0 0
    %305 = vmatprep.subr.bf16.mxu0 0
    %306 = vmatpush2.bf16.msra.mxu0 0
    %307 = vmatprep.mubr.bf16.mxu0 0
    %308 = vmatmul.mubr.bf16.gmra.mxu0 %v175
    %v309 = vpop.f32.mrf.mxu0
    %v310 = vadd.f32 0.0, %v309
    %v311 = vpop.f32.mrf.mxu0
    %v312 = vadd.f32 0.0, %v311
    %v313 = vpop.f32.mrf.mxu0
    %v314 = vadd.f32 0.0, %v313
    %v315 = vpop.f32.mrf.mxu0
    %v316 = vadd.f32 0.0, %v315
    %317 = vmatprep.mubr.bf16.mxu0 0
    %318 = vmatmul.mubr.bf16.gmra.mxu0 %v176
    %v319 = vpop.f32.mrf.mxu0
    %v320 = vadd.f32 0.0, %v319
    %v321 = vpop.f32.mrf.mxu0
    %v322 = vadd.f32 0.0, %v321
    %v323 = vpop.f32.mrf.mxu0
    %v324 = vadd.f32 0.0, %v323
    %v325 = vpop.f32.mrf.mxu0
    %v326 = vadd.f32 0.0, %v325
    %327 = vmatprep.mubr.bf16.mxu0 0
    %328 = vmatmul.mubr.bf16.gmra.mxu0 %v177
    %v329 = vpop.f32.mrf.mxu0
    %v330 = vadd.f32 0.0, %v329
    %v331 = vpop.f32.mrf.mxu0
    %v332 = vadd.f32 0.0, %v331
    %v333 = vpop.f32.mrf.mxu0
    %v334 = vadd.f32 0.0, %v333
    %v335 = vpop.f32.mrf.mxu0
    %v336 = vadd.f32 0.0, %v335
    %337 = vmatprep.mubr.bf16.mxu0 0
    %338 = vmatmul.mubr.bf16.gmra.mxu0 %v178
    %v339 = vpop.f32.mrf.mxu0
    %v340 = vadd.f32 0.0, %v339
    %v341 = vpop.f32.mrf.mxu0
    %v342 = vadd.f32 0.0, %v341
    %v343 = vpop.f32.mrf.mxu0
    %v344 = vadd.f32 0.0, %v343
    %v345 = vpop.f32.mrf.mxu0
    %v346 = vadd.f32 0.0, %v345
    %347 = vdwg.mxu0
    %v348 = vld [vmem:[#allocation2] sm:$0xff]
    %v349 = vld [vmem:[#allocation2 + $0x8] sm:$0xff]
    %v350 = vld [vmem:[#allocation2 + $0x10] sm:$0xff]
    %v351 = vld [vmem:[#allocation2 + $0x18] sm:$0xff]
    %v352 = vld [vmem:[#allocation2 + $0x20] sm:$0xff]
    %v353 = vld [vmem:[#allocation2 + $0x28] sm:$0xff]
    %v354 = vld [vmem:[#allocation2 + $0x30] sm:$0xff]
    %v355 = vld [vmem:[#allocation2 + $0x38] sm:$0xff]
    %v356 = vld [vmem:[#allocation2 + $0x40] sm:$0xff]
    %v357 = vld [vmem:[#allocation2 + $0x48] sm:$0xff]
    %v358 = vld [vmem:[#allocation2 + $0x50] sm:$0xff]
    %v359 = vld [vmem:[#allocation2 + $0x58] sm:$0xff]
    %v360 = vld [vmem:[#allocation2 + $0x60] sm:$0xff]
    %v361 = vld [vmem:[#allocation2 + $0x68] sm:$0xff]
    %v362 = vld [vmem:[#allocation2 + $0x70] sm:$0xff]
    %v363 = vld [vmem:[#allocation2 + $0x78] sm:$0xff]
    %vm364 = vcmp.lt.s32.totalorder %v78, 64
    %v381 = vunpack.c.l.b16 %v348
    %v382 = vunpack.c.h.b16 %v348
    %v383 = vunpack.c.l.b16 %v349
    %v384 = vunpack.c.h.b16 %v349
    %v385 = vunpack.c.l.b16 %v350
    %v386 = vunpack.c.h.b16 %v350
    %v387 = vunpack.c.l.b16 %v351
    %v388 = vunpack.c.h.b16 %v351
    %v389 = vunpack.c.l.b16 %v352
    %v390 = vunpack.c.h.b16 %v352
    %v391 = vunpack.c.l.b16 %v353
    %v392 = vunpack.c.h.b16 %v353
    %v393 = vunpack.c.l.b16 %v354
    %v394 = vunpack.c.h.b16 %v354
    %v395 = vunpack.c.l.b16 %v355
    %v396 = vunpack.c.h.b16 %v355
    %v397 = vunpack.c.l.b16 %v356
    %v398 = vunpack.c.h.b16 %v356
    %v399 = vunpack.c.l.b16 %v357
    %v400 = vunpack.c.h.b16 %v357
    %v401 = vunpack.c.l.b16 %v358
    %v402 = vunpack.c.h.b16 %v358
    %v403 = vunpack.c.l.b16 %v359
    %v404 = vunpack.c.h.b16 %v359
    %v405 = vunpack.c.l.b16 %v360
    %v406 = vunpack.c.h.b16 %v360
    %v407 = vunpack.c.l.b16 %v361
    %v408 = vunpack.c.h.b16 %v361
    %v409 = vunpack.c.l.b16 %v362
    %v410 = vunpack.c.h.b16 %v362
    %v411 = vunpack.c.l.b16 %v363
    %v412 = vunpack.c.h.b16 %v363
    %v413 = vpack.c.b16 %v383, %v381
    %v414 = vpack.c.b16 %v384, %v382
    %v415 = vpack.c.b16 %v387, %v385
    %v416 = vpack.c.b16 %v388, %v386
    %v417 = vpack.c.b16 %v391, %v389
    %v418 = vpack.c.b16 %v392, %v390
    %v419 = vpack.c.b16 %v395, %v393
    %v420 = vpack.c.b16 %v396, %v394
    %v421 = vpack.c.b16 %v399, %v397
    %v422 = vpack.c.b16 %v400, %v398
    %v423 = vpack.c.b16 %v403, %v401
    %v424 = vpack.c.b16 %v404, %v402
    %v425 = vpack.c.b16 %v407, %v405
    %v426 = vpack.c.b16 %v408, %v406
    %v427 = vpack.c.b16 %v411, %v409
    %v428 = vpack.c.b16 %v412, %v410
    %445 = vmatprep.subr.bf16.mxu0 %v428
    %446 = vmatpush1.bf16.msra.mxu0 %v427
    %447 = vmatprep.subr.bf16.mxu0 %v426
    %448 = vmatpush1.bf16.msra.mxu0 %v425
    %449 = vmatprep.subr.bf16.mxu0 %v424
    %450 = vmatpush1.bf16.msra.mxu0 %v423
    %451 = vmatprep.subr.bf16.mxu0 %v422
    %452 = vmatpush1.bf16.msra.mxu0 %v421
    %453 = vmatprep.subr.bf16.mxu0 %v420
    %454 = vmatpush1.bf16.msra.mxu0 %v419
    %455 = vmatprep.subr.bf16.mxu0 %v418
    %456 = vmatpush1.bf16.msra.mxu0 %v417
    %457 = vmatprep.subr.bf16.mxu0 %v416
    %458 = vmatpush1.bf16.msra.mxu0 %v415
    %459 = vmatprep.subr.bf16.mxu0 %v414
    %460 = vmatpush1.bf16.msra.mxu0 %v413
    %461 = vmatprep.subr.bf16.mxu0 0
    %462 = vmatpush2.bf16.msra.mxu0 0
    %463 = vmatprep.subr.bf16.mxu0 0
    %464 = vmatpush2.bf16.msra.mxu0 0
    %465 = vmatprep.subr.bf16.mxu0 0
    %466 = vmatpush2.bf16.msra.mxu0 0
    %467 = vmatprep.subr.bf16.mxu0 0
    %468 = vmatpush2.bf16.msra.mxu0 0
    %469 = vmatprep.subr.bf16.mxu0 0
    %470 = vmatpush2.bf16.msra.mxu0 0
    %471 = vmatprep.subr.bf16.mxu0 0
    %472 = vmatpush2.bf16.msra.mxu0 0
    %473 = vmatprep.subr.bf16.mxu0 0
    %474 = vmatpush2.bf16.msra.mxu0 0
    %475 = vmatprep.subr.bf16.mxu0 0
    %476 = vmatpush2.bf16.msra.mxu0 0
    %477 = vmatprep.mubr.bf16.mxu0 0
    %478 = vmatmul.mubr.bf16.gmra.mxu0 0
    %v479 = vpop.f32.mrf.mxu0
    %v480 = vadd.f32 0.0, %v479
    %v481 = vpop.f32.mrf.mxu0
    %v482 = vadd.f32 0.0, %v481
    %v483 = vpop.f32.mrf.mxu0
    %v484 = vpop.f32.mrf.mxu0
    %485 = vdwg.mxu0
    %v486 = vadd.f32 %v310, %v480
    %v487 = vadd.f32 %v312, %v482
    %v488 = vtanh.pop %v486
    %v489 = vmul.f32 %v488, 0.5
    %v490 = vadd.f32 %v489, 0.5
    %v491 = vtanh.pop %v487
    %v492 = vmul.f32 %v491, 0.5
    %v493 = vadd.f32 %v492, 0.5
    %v494 = vsel %vm364, %v491, %v493
    %v495 = vsel %vm364, %v491, 0.0
    %v496 = vmul.f32 %v490, %v495
    %497 = vrot.lane.b32.xlu0 %v496, 64
    %v498 = vpop.permute.xlu0 %497
    %v499 = vadd.f32 %v496, %v498
    %v500 = vtanh.pop %v499
    %v501 = vmul.f32 %v494, %v500
    %v502 = vpack.c.bf16 %v501, %v501
    %503 = vmatprep.subr.bf16.mxu0 %v428
    %504 = vmatpush1.bf16.msra.mxu0 %v427
    %505 = vmatprep.subr.bf16.mxu0 %v426
    %506 = vmatpush1.bf16.msra.mxu0 %v425
    %507 = vmatprep.subr.bf16.mxu0 %v424
    %508 = vmatpush1.bf16.msra.mxu0 %v423
    %509 = vmatprep.subr.bf16.mxu0 %v422
    %510 = vmatpush1.bf16.msra.mxu0 %v421
    %511 = vmatprep.subr.bf16.mxu0 %v420
    %512 = vmatpush1.bf16.msra.mxu0 %v419
    %513 = vmatprep.subr.bf16.mxu0 %v418
    %514 = vmatpush1.bf16.msra.mxu0 %v417
    %515 = vmatprep.subr.bf16.mxu0 %v416
    %516 = vmatpush1.bf16.msra.mxu0 %v415
    %517 = vmatprep.subr.bf16.mxu0 %v414
    %518 = vmatpush1.bf16.msra.mxu0 %v413
    %519 = vmatprep.subr.bf16.mxu0 0
    %520 = vmatpush2.bf16.msra.mxu0 0
    %521 = vmatprep.subr.bf16.mxu0 0
    %522 = vmatpush2.bf16.msra.mxu0 0
    %523 = vmatprep.subr.bf16.mxu0 0
    %524 = vmatpush2.bf16.msra.mxu0 0
    %525 = vmatprep.subr.bf16.mxu0 0
    %526 = vmatpush2.bf16.msra.mxu0 0
    %527 = vmatprep.subr.bf16.mxu0 0
    %528 = vmatpush2.bf16.msra.mxu0 0
    %529 = vmatprep.subr.bf16.mxu0 0
    %530 = vmatpush2.bf16.msra.mxu0 0
    %531 = vmatprep.subr.bf16.mxu0 0
    %532 = vmatpush2.bf16.msra.mxu0 0
    %533 = vmatprep.subr.bf16.mxu0 0
    %534 = vmatpush2.bf16.msra.mxu0 0
    %535 = vmatprep.mubr.bf16.mxu0 0
    %536 = vmatmul.mubr.bf16.gmra.mxu0 %v502
    %v537 = vpop.f32.mrf.mxu0
    %v538 = vadd.f32 0.0, %v537
    %v539 = vpop.f32.mrf.mxu0
    %v540 = vadd.f32 0.0, %v539
    %v541 = vpop.f32.mrf.mxu0
    %v542 = vpop.f32.mrf.mxu0
    %543 = vdwg.mxu0
    %v544 = vadd.f32 %v314, %v538
    %v545 = vadd.f32 %v316, %v540
    %v546 = vtanh.pop %v544
    %v547 = vmul.f32 %v546, 0.5
    %v548 = vadd.f32 %v547, 0.5
    %v549 = vtanh.pop %v545
    %v550 = vmul.f32 %v549, 0.5
    %v551 = vadd.f32 %v550, 0.5
    %v552 = vsel %vm364, %v549, %v551
    %v553 = vsel %vm364, %v549, %v499
    %v554 = vmul.f32 %v548, %v553
    %555 = vrot.lane.b32.xlu0 %v554, 64
    %v556 = vpop.permute.xlu0 %555
    %v557 = vadd.f32 %v554, %v556
    %v558 = vtanh.pop %v557
    %v559 = vmul.f32 %v552, %v558
    %v560 = vpack.c.bf16 %v559, %v559
    %561 = vmatprep.subr.bf16.mxu0 %v428
    %562 = vmatpush1.bf16.msra.mxu0 %v427
    %563 = vmatprep.subr.bf16.mxu0 %v426
    %564 = vmatpush1.bf16.msra.mxu0 %v425
    %565 = vmatprep.subr.bf16.mxu0 %v424
    %566 = vmatpush1.bf16.msra.mxu0 %v423
    %567 = vmatprep.subr.bf16.mxu0 %v422
    %568 = vmatpush1.bf16.msra.mxu0 %v421
    %569 = vmatprep.subr.bf16.mxu0 %v420
    %570 = vmatpush1.bf16.msra.mxu0 %v419
    %571 = vmatprep.subr.bf16.mxu0 %v418
    %572 = vmatpush1.bf16.msra.mxu0 %v417
    %573 = vmatprep.subr.bf16.mxu0 %v416
    %574 = vmatpush1.bf16.msra.mxu0 %v415
    %575 = vmatprep.subr.bf16.mxu0 %v414
    %576 = vmatpush1.bf16.msra.mxu0 %v413
    %577 = vmatprep.subr.bf16.mxu0 0
    %578 = vmatpush2.bf16.msra.mxu0 0
    %579 = vmatprep.subr.bf16.mxu0 0
    %580 = vmatpush2.bf16.msra.mxu0 0
    %581 = vmatprep.subr.bf16.mxu0 0
    %582 = vmatpush2.bf16.msra.mxu0 0
    %583 = vmatprep.subr.bf16.mxu0 0
    %584 = vmatpush2.bf16.msra.mxu0 0
    %585 = vmatprep.subr.bf16.mxu0 0
    %586 = vmatpush2.bf16.msra.mxu0 0
    %587 = vmatprep.subr.bf16.mxu0 0
    %588 = vmatpush2.bf16.msra.mxu0 0
    %589 = vmatprep.subr.bf16.mxu0 0
    %590 = vmatpush2.bf16.msra.mxu0 0
    %591 = vmatprep.subr.bf16.mxu0 0
    %592 = vmatpush2.bf16.msra.mxu0 0
    %593 = vmatprep.mubr.bf16.mxu0 0
    %594 = vmatmul.mubr.bf16.gmra.mxu0 %v560
    %v595 = vpop.f32.mrf.mxu0
    %v596 = vadd.f32 0.0, %v595
    %v597 = vpop.f32.mrf.mxu0
    %v598 = vadd.f32 0.0, %v597
    %v599 = vpop.f32.mrf.mxu0
    %v600 = vpop.f32.mrf.mxu0
    %601 = vdwg.mxu0
    %v602 = vadd.f32 %v320, %v596
    %v603 = vadd.f32 %v322, %v598
    %v604 = vtanh.pop %v602
    %v605 = vmul.f32 %v604, 0.5
    %v606 = vadd.f32 %v605, 0.5
    %v607 = vtanh.pop %v603
    %v608 = vmul.f32 %v607, 0.5
    %v609 = vadd.f32 %v608, 0.5
    %v610 = vsel %vm364, %v607, %v609
    %v611 = vsel %vm364, %v607, %v557
    %v612 = vmul.f32 %v606, %v611
    %613 = vrot.lane.b32.xlu0 %v612, 64
    %v614 = vpop.permute.xlu0 %613
    %v615 = vadd.f32 %v612, %v614
    %v616 = vtanh.pop %v615
    %v617 = vmul.f32 %v610, %v616
    %v618 = vpack.c.bf16 %v617, %v617
    %619 = vmatprep.subr.bf16.mxu0 %v428
    %620 = vmatpush1.bf16.msra.mxu0 %v427
    %621 = vmatprep.subr.bf16.mxu0 %v426
    %622 = vmatpush1.bf16.msra.mxu0 %v425
    %623 = vmatprep.subr.bf16.mxu0 %v424
    %624 = vmatpush1.bf16.msra.mxu0 %v423
    %625 = vmatprep.subr.bf16.mxu0 %v422
    %626 = vmatpush1.bf16.msra.mxu0 %v421
    %627 = vmatprep.subr.bf16.mxu0 %v420
    %628 = vmatpush1.bf16.msra.mxu0 %v419
    %629 = vmatprep.subr.bf16.mxu0 %v418
    %630 = vmatpush1.bf16.msra.mxu0 %v417
    %631 = vmatprep.subr.bf16.mxu0 %v416
    %632 = vmatpush1.bf16.msra.mxu0 %v415
    %633 = vmatprep.subr.bf16.mxu0 %v414
    %634 = vmatpush1.bf16.msra.mxu0 %v413
    %635 = vmatprep.subr.bf16.mxu0 0
    %636 = vmatpush2.bf16.msra.mxu0 0
    %637 = vmatprep.subr.bf16.mxu0 0
    %638 = vmatpush2.bf16.msra.mxu0 0
    %639 = vmatprep.subr.bf16.mxu0 0
    %640 = vmatpush2.bf16.msra.mxu0 0
    %641 = vmatprep.subr.bf16.mxu0 0
    %642 = vmatpush2.bf16.msra.mxu0 0
    %643 = vmatprep.subr.bf16.mxu0 0
    %644 = vmatpush2.bf16.msra.mxu0 0
    %645 = vmatprep.subr.bf16.mxu0 0
    %646 = vmatpush2.bf16.msra.mxu0 0
    %647 = vmatprep.subr.bf16.mxu0 0
    %648 = vmatpush2.bf16.msra.mxu0 0
    %649 = vmatprep.subr.bf16.mxu0 0
    %650 = vmatpush2.bf16.msra.mxu0 0
    %651 = vmatprep.mubr.bf16.mxu0 0
    %652 = vmatmul.mubr.bf16.gmra.mxu0 %v618
    %v653 = vpop.f32.mrf.mxu0
    %v654 = vadd.f32 0.0, %v653
    %v655 = vpop.f32.mrf.mxu0
    %v656 = vadd.f32 0.0, %v655
    %v657 = vpop.f32.mrf.mxu0
    %v658 = vpop.f32.mrf.mxu0
    %659 = vdwg.mxu0
    %v660 = vadd.f32 %v324, %v654
    %v661 = vadd.f32 %v326, %v656
    %v662 = vtanh.pop %v660
    %v663 = vmul.f32 %v662, 0.5
    %v664 = vadd.f32 %v663, 0.5
    %v665 = vtanh.pop %v661
    %v666 = vmul.f32 %v665, 0.5
    %v667 = vadd.f32 %v666, 0.5
    %v668 = vsel %vm364, %v665, %v667
    %v669 = vsel %vm364, %v665, %v615
    %v670 = vmul.f32 %v664, %v669
    %671 = vrot.lane.b32.xlu0 %v670, 64
    %v672 = vpop.permute.xlu0 %671
    %v673 = vadd.f32 %v670, %v672
    %v674 = vtanh.pop %v673
    %v675 = vmul.f32 %v668, %v674
    %v676 = vpack.c.bf16 %v675, %v675
    %677 = vmatprep.subr.bf16.mxu0 %v428
    %678 = vmatpush1.bf16.msra.mxu0 %v427
    %679 = vmatprep.subr.bf16.mxu0 %v426
    %680 = vmatpush1.bf16.msra.mxu0 %v425
    %681 = vmatprep.subr.bf16.mxu0 %v424
    %682 = vmatpush1.bf16.msra.mxu0 %v423
    %683 = vmatprep.subr.bf16.mxu0 %v422
    %684 = vmatpush1.bf16.msra.mxu0 %v421
    %685 = vmatprep.subr.bf16.mxu0 %v420
    %686 = vmatpush1.bf16.msra.mxu0 %v419
    %687 = vmatprep.subr.bf16.mxu0 %v418
    %688 = vmatpush1.bf16.msra.mxu0 %v417
    %689 = vmatprep.subr.bf16.mxu0 %v416
    %690 = vmatpush1.bf16.msra.mxu0 %v415
    %691 = vmatprep.subr.bf16.mxu0 %v414
    %692 = vmatpush1.bf16.msra.mxu0 %v413
    %693 = vmatprep.subr.bf16.mxu0 0
    %694 = vmatpush2.bf16.msra.mxu0 0
    %695 = vmatprep.subr.bf16.mxu0 0
    %696 = vmatpush2.bf16.msra.mxu0 0
    %697 = vmatprep.subr.bf16.mxu0 0
    %698 = vmatpush2.bf16.msra.mxu0 0
    %699 = vmatprep.subr.bf16.mxu0 0
    %700 = vmatpush2.bf16.msra.mxu0 0
    %701 = vmatprep.subr.bf16.mxu0 0
    %702 = vmatpush2.bf16.msra.mxu0 0
    %703 = vmatprep.subr.bf16.mxu0 0
    %704 = vmatpush2.bf16.msra.mxu0 0
    %705 = vmatprep.subr.bf16.mxu0 0
    %706 = vmatpush2.bf16.msra.mxu0 0
    %707 = vmatprep.subr.bf16.mxu0 0
    %708 = vmatpush2.bf16.msra.mxu0 0
    %709 = vmatprep.mubr.bf16.mxu0 0
    %710 = vmatmul.mubr.bf16.gmra.mxu0 %v676
    %v711 = vpop.f32.mrf.mxu0
    %v712 = vadd.f32 0.0, %v711
    %v713 = vpop.f32.mrf.mxu0
    %v714 = vadd.f32 0.0, %v713
    %v715 = vpop.f32.mrf.mxu0
    %v716 = vpop.f32.mrf.mxu0
    %717 = vdwg.mxu0
    %v718 = vadd.f32 %v330, %v712
    %v719 = vadd.f32 %v332, %v714
    %v720 = vtanh.pop %v718
    %v721 = vmul.f32 %v720, 0.5
    %v722 = vadd.f32 %v721, 0.5
    %v723 = vtanh.pop %v719
    %v724 = vmul.f32 %v723, 0.5
    %v725 = vadd.f32 %v724, 0.5
    %v726 = vsel %vm364, %v723, %v725
    %v727 = vsel %vm364, %v723, %v673
    %v728 = vmul.f32 %v722, %v727
    %729 = vrot.lane.b32.xlu0 %v728, 64
    %v730 = vpop.permute.xlu0 %729
    %v731 = vadd.f32 %v728, %v730
    %v732 = vtanh.pop %v731
    %v733 = vmul.f32 %v726, %v732
    %v734 = vpack.c.bf16 %v733, %v733
    %735 = vmatprep.subr.bf16.mxu0 %v428
    %736 = vmatpush1.bf16.msra.mxu0 %v427
    %737 = vmatprep.subr.bf16.mxu0 %v426
    %738 = vmatpush1.bf16.msra.mxu0 %v425
    %739 = vmatprep.subr.bf16.mxu0 %v424
    %740 = vmatpush1.bf16.msra.mxu0 %v423
    %741 = vmatprep.subr.bf16.mxu0 %v422
    %742 = vmatpush1.bf16.msra.mxu0 %v421
    %743 = vmatprep.subr.bf16.mxu0 %v420
    %744 = vmatpush1.bf16.msra.mxu0 %v419
    %745 = vmatprep.subr.bf16.mxu0 %v418
    %746 = vmatpush1.bf16.msra.mxu0 %v417
    %747 = vmatprep.subr.bf16.mxu0 %v416
    %748 = vmatpush1.bf16.msra.mxu0 %v415
    %749 = vmatprep.subr.bf16.mxu0 %v414
    %750 = vmatpush1.bf16.msra.mxu0 %v413
    %751 = vmatprep.subr.bf16.mxu0 0
    %752 = vmatpush2.bf16.msra.mxu0 0
    %753 = vmatprep.subr.bf16.mxu0 0
    %754 = vmatpush2.bf16.msra.mxu0 0
    %755 = vmatprep.subr.bf16.mxu0 0
    %756 = vmatpush2.bf16.msra.mxu0 0
    %757 = vmatprep.subr.bf16.mxu0 0
    %758 = vmatpush2.bf16.msra.mxu0 0
    %759 = vmatprep.subr.bf16.mxu0 0
    %760 = vmatpush2.bf16.msra.mxu0 0
    %761 = vmatprep.subr.bf16.mxu0 0
    %762 = vmatpush2.bf16.msra.mxu0 0
    %763 = vmatprep.subr.bf16.mxu0 0
    %764 = vmatpush2.bf16.msra.mxu0 0
    %765 = vmatprep.subr.bf16.mxu0 0
    %766 = vmatpush2.bf16.msra.mxu0 0
    %767 = vmatprep.mubr.bf16.mxu0 0
    %768 = vmatmul.mubr.bf16.gmra.mxu0 %v734
    %v769 = vpop.f32.mrf.mxu0
    %v770 = vadd.f32 0.0, %v769
    %v771 = vpop.f32.mrf.mxu0
    %v772 = vadd.f32 0.0, %v771
    %v773 = vpop.f32.mrf.mxu0
    %v774 = vpop.f32.mrf.mxu0
    %775 = vdwg.mxu0
    %v776 = vadd.f32 %v334, %v770
    %v777 = vadd.f32 %v336, %v772
    %v778 = vtanh.pop %v776
    %v779 = vmul.f32 %v778, 0.5
    %v780 = vadd.f32 %v779, 0.5
    %v781 = vtanh.pop %v777
    %v782 = vmul.f32 %v781, 0.5
    %v783 = vadd.f32 %v782, 0.5
    %v784 = vsel %vm364, %v781, %v783
    %v785 = vsel %vm364, %v781, %v731
    %v786 = vmul.f32 %v780, %v785
    %787 = vrot.lane.b32.xlu0 %v786, 64
    %v788 = vpop.permute.xlu0 %787
    %v789 = vadd.f32 %v786, %v788
    %v790 = vtanh.pop %v789
    %v791 = vmul.f32 %v784, %v790
    %v792 = vpack.c.bf16 %v791, %v791
    %793 = vmatprep.subr.bf16.mxu0 %v428
    %794 = vmatpush1.bf16.msra.mxu0 %v427
    %795 = vmatprep.subr.bf16.mxu0 %v426
    %796 = vmatpush1.bf16.msra.mxu0 %v425
    %797 = vmatprep.subr.bf16.mxu0 %v424
    %798 = vmatpush1.bf16.msra.mxu0 %v423
    %799 = vmatprep.subr.bf16.mxu0 %v422
    %800 = vmatpush1.bf16.msra.mxu0 %v421
    %801 = vmatprep.subr.bf16.mxu0 %v420
    %802 = vmatpush1.bf16.msra.mxu0 %v419
    %803 = vmatprep.subr.bf16.mxu0 %v418
    %804 = vmatpush1.bf16.msra.mxu0 %v417
    %805 = vmatprep.subr.bf16.mxu0 %v416
    %806 = vmatpush1.bf16.msra.mxu0 %v415
    %807 = vmatprep.subr.bf16.mxu0 %v414
    %808 = vmatpush1.bf16.msra.mxu0 %v413
    %809 = vmatprep.subr.bf16.mxu0 0
    %810 = vmatpush2.bf16.msra.mxu0 0
    %811 = vmatprep.subr.bf16.mxu0 0
    %812 = vmatpush2.bf16.msra.mxu0 0
    %813 = vmatprep.subr.bf16.mxu0 0
    %814 = vmatpush2.bf16.msra.mxu0 0
    %815 = vmatprep.subr.bf16.mxu0 0
    %816 = vmatpush2.bf16.msra.mxu0 0
    %817 = vmatprep.subr.bf16.mxu0 0
    %818 = vmatpush2.bf16.msra.mxu0 0
    %819 = vmatprep.subr.bf16.mxu0 0
    %820 = vmatpush2.bf16.msra.mxu0 0
    %821 = vmatprep.subr.bf16.mxu0 0
    %822 = vmatpush2.bf16.msra.mxu0 0
    %823 = vmatprep.subr.bf16.mxu0 0
    %824 = vmatpush2.bf16.msra.mxu0 0
    %825 = vmatprep.mubr.bf16.mxu0 0
    %826 = vmatmul.mubr.bf16.gmra.mxu0 %v792
    %v827 = vpop.f32.mrf.mxu0
    %v828 = vadd.f32 0.0, %v827
    %v829 = vpop.f32.mrf.mxu0
    %v830 = vadd.f32 0.0, %v829
    %v831 = vpop.f32.mrf.mxu0
    %v832 = vpop.f32.mrf.mxu0
    %833 = vdwg.mxu0
    %v834 = vadd.f32 %v340, %v828
    %v835 = vadd.f32 %v342, %v830
    %v836 = vtanh.pop %v834
    %v837 = vmul.f32 %v836, 0.5
    %v838 = vadd.f32 %v837, 0.5
    %v839 = vtanh.pop %v835
    %v840 = vmul.f32 %v839, 0.5
    %v841 = vadd.f32 %v840, 0.5
    %v842 = vsel %vm364, %v839, %v841
    %v843 = vsel %vm364, %v839, %v789
    %v844 = vmul.f32 %v838, %v843
    %845 = vrot.lane.b32.xlu0 %v844, 64
    %v846 = vpop.permute.xlu0 %845
    %v847 = vadd.f32 %v844, %v846
    %v848 = vtanh.pop %v847
    %v849 = vmul.f32 %v842, %v848
    %v850 = vpack.c.bf16 %v849, %v849
    %851 = vmatprep.subr.bf16.mxu0 %v428
    %852 = vmatpush1.bf16.msra.mxu0 %v427
    %853 = vmatprep.subr.bf16.mxu0 %v426
    %854 = vmatpush1.bf16.msra.mxu0 %v425
    %855 = vmatprep.subr.bf16.mxu0 %v424
    %856 = vmatpush1.bf16.msra.mxu0 %v423
    %857 = vmatprep.subr.bf16.mxu0 %v422
    %858 = vmatpush1.bf16.msra.mxu0 %v421
    %859 = vmatprep.subr.bf16.mxu0 %v420
    %860 = vmatpush1.bf16.msra.mxu0 %v419
    %861 = vmatprep.subr.bf16.mxu0 %v418
    %862 = vmatpush1.bf16.msra.mxu0 %v417
    %863 = vmatprep.subr.bf16.mxu0 %v416
    %864 = vmatpush1.bf16.msra.mxu0 %v415
    %865 = vmatprep.subr.bf16.mxu0 %v414
    %866 = vmatpush1.bf16.msra.mxu0 %v413
    %867 = vmatprep.subr.bf16.mxu0 0
    %868 = vmatpush2.bf16.msra.mxu0 0
    %869 = vmatprep.subr.bf16.mxu0 0
    %870 = vmatpush2.bf16.msra.mxu0 0
    %871 = vmatprep.subr.bf16.mxu0 0
    %872 = vmatpush2.bf16.msra.mxu0 0
    %873 = vmatprep.subr.bf16.mxu0 0
    %874 = vmatpush2.bf16.msra.mxu0 0
    %875 = vmatprep.subr.bf16.mxu0 0
    %876 = vmatpush2.bf16.msra.mxu0 0
    %877 = vmatprep.subr.bf16.mxu0 0
    %878 = vmatpush2.bf16.msra.mxu0 0
    %879 = vmatprep.subr.bf16.mxu0 0
    %880 = vmatpush2.bf16.msra.mxu0 0
    %881 = vmatprep.subr.bf16.mxu0 0
    %882 = vmatpush2.bf16.msra.mxu0 0
    %883 = vmatprep.mubr.bf16.mxu0 0
    %884 = vmatmul.mubr.bf16.gmra.mxu0 %v850
    %v885 = vpop.f32.mrf.mxu0
    %v886 = vadd.f32 0.0, %v885
    %v887 = vpop.f32.mrf.mxu0
    %v888 = vadd.f32 0.0, %v887
    %v889 = vpop.f32.mrf.mxu0
    %v890 = vpop.f32.mrf.mxu0
    %891 = vdwg.mxu0
    %v892 = vadd.f32 %v344, %v886
    %v893 = vadd.f32 %v346, %v888
    %v894 = vtanh.pop %v892
    %v895 = vmul.f32 %v894, 0.5
    %v896 = vadd.f32 %v895, 0.5
    %v897 = vtanh.pop %v893
    %v898 = vmul.f32 %v897, 0.5
    %v899 = vadd.f32 %v898, 0.5
    %v900 = vsel %vm364, %v897, %v899
    %v901 = vsel %vm364, %v897, %v847
    %v902 = vmul.f32 %v896, %v901
    %903 = vrot.lane.b32.xlu0 %v902, 64
    %v904 = vpop.permute.xlu0 %903
    %v905 = vadd.f32 %v902, %v904
    %v906 = vtanh.pop %v905
    %v907 = vmul.f32 %v900, %v906
    %v908 = vld [vmem:[%s4] sm:$0xff]
    %v909 = vld [vmem:[%s4 + $0x8] sm:$0xff]
    %v910 = vld [vmem:[%s4 + $0x10] sm:$0xff]
    %v911 = vld [vmem:[%s4 + $0x18] sm:$0xff]
    %v912 = vld [vmem:[%s4 + $0x20] sm:$0xff]
    %v913 = vld [vmem:[%s4 + $0x28] sm:$0xff]
    %v914 = vld [vmem:[%s4 + $0x30] sm:$0xff]
    %v915 = vld [vmem:[%s4 + $0x38] sm:$0xff]
    %v916 = vld [vmem:[%s5] sm:$0x1]
    %v918 = vlaneseq
    %v919 = vshrl.u32 %v918, 7
    %v920 = vsub.s32 0, %v919
    %v921 = vrot.slane %v916, %v920
    %924 = vrot.lane.b32.xlu0 %v907, 64
    %v925 = vpop.permute.xlu0 %924
    %vm926 = vcmask 523264
    %v927 = vsel %vm926, %v925, 0
    %929 = vmatprep.subr.mxu0 0.0
    %930 = vmatpush1.msra.mxu0 0.0
    %931 = vmatprep.subr.mxu0 0.0
    %932 = vmatpush1.msra.mxu0 0.0
    %933 = vmatprep.subr.mxu0 0.0
    %934 = vmatpush1.msra.mxu0 0.0
    %935 = vmatprep.subr.mxu0 0.0
    %936 = vmatpush1.msra.mxu0 0.0
    %937 = vmatprep.subr.mxu0 0.0
    %938 = vmatpush1.msra.mxu0 0.0
    %939 = vmatprep.subr.mxu0 0.0
    %940 = vmatpush1.msra.mxu0 0.0
    %941 = vmatprep.subr.mxu0 0.0
    %942 = vmatpush1.msra.mxu0 0.0
    %943 = vmatprep.subr.mxu0 0.0
    %944 = vmatpush1.msra.mxu0 0.0
    %945 = vmatprep.subr.mxu0 0.0
    %946 = vmatpush1.msra.mxu0 %v915
    %947 = vmatprep.subr.mxu0 0.0
    %948 = vmatpush1.msra.mxu0 %v914
    %949 = vmatprep.subr.mxu0 0.0
    %950 = vmatpush1.msra.mxu0 %v913
    %951 = vmatprep.subr.mxu0 0.0
    %952 = vmatpush1.msra.mxu0 %v912
    %953 = vmatprep.subr.mxu0 0.0
    %954 = vmatpush1.msra.mxu0 %v911
    %955 = vmatprep.subr.mxu0 0.0
    %956 = vmatpush1.msra.mxu0 %v910
    %957 = vmatprep.subr.mxu0 0.0
    %958 = vmatpush1.msra.mxu0 %v909
    %959 = vmatprep.subr.mxu0 0.0
    %960 = vmatpush1.msra.mxu0 %v908
    %961 = vmatprep.subr.mxu0 0.0
    %962 = vmatpush2.msra.mxu0 0.0
    %963 = vmatprep.subr.mxu0 0.0
    %964 = vmatpush2.msra.mxu0 0.0
    %965 = vmatprep.subr.mxu0 0.0
    %966 = vmatpush2.msra.mxu0 0.0
    %967 = vmatprep.subr.mxu0 0.0
    %968 = vmatpush2.msra.mxu0 0.0
    %969 = vmatprep.subr.mxu0 0.0
    %970 = vmatpush2.msra.mxu0 0.0
    %971 = vmatprep.subr.mxu0 0.0
    %972 = vmatpush2.msra.mxu0 0.0
    %973 = vmatprep.subr.mxu0 0.0
    %974 = vmatpush2.msra.mxu0 0.0
    %975 = vmatprep.subr.mxu0 0.0
    %976 = vmatpush2.msra.mxu0 0.0
    %977 = vmatprep.subr.mxu0 0.0
    %978 = vmatpush2.msra.mxu0 0.0
    %979 = vmatprep.subr.mxu0 0.0
    %980 = vmatpush2.msra.mxu0 0.0
    %981 = vmatprep.subr.mxu0 0.0
    %982 = vmatpush2.msra.mxu0 0.0
    %983 = vmatprep.subr.mxu0 0.0
    %984 = vmatpush2.msra.mxu0 0.0
    %985 = vmatprep.subr.mxu0 0.0
    %986 = vmatpush2.msra.mxu0 0.0
    %987 = vmatprep.subr.mxu0 0.0
    %988 = vmatpush2.msra.mxu0 0.0
    %989 = vmatprep.subr.mxu0 0.0
    %990 = vmatpush2.msra.mxu0 0.0
    %991 = vmatprep.subr.mxu0 0.0
    %992 = vmatpush2.msra.mxu0 0.0
    %993 = vmatprep.mubr.f32.mxu0 0.0
    %994 = vmatmul.mubr.f32.gmra.mxu0 %v927
    %v995 = vpop.f32.mrf.mxu0
    %v996 = vadd.f32 %v921, %v995
    %v997 = vpop.f32.mrf.mxu0
    %998 = vdwg.mxu0
    %v999 = vtanh.pop %v996
    %v1000 = vld [vmem:[#allocation4] sm:$0xff]
    %v1001 = vld [vmem:[#allocation4 + $0x8] sm:$0xff]
    %v1002 = vld [vmem:[#allocation4 + $0x10] sm:$0xff]
    %v1003 = vld [vmem:[#allocation4 + $0x18] sm:$0xff]
    %v1004 = vld [vmem:[#allocation4 + $0x20] sm:$0xff]
    %v1005 = vld [vmem:[#allocation4 + $0x28] sm:$0xff]
    %v1006 = vld [vmem:[#allocation4 + $0x30] sm:$0xff]
    %v1007 = vld [vmem:[#allocation4 + $0x38] sm:$0xff]
    %v1008 = vld [vmem:[#allocation4 + $0x40] sm:$0xff]
    %v1009 = vld [vmem:[#allocation4 + $0x48] sm:$0xff]
    %v1010 = vld [vmem:[#allocation4 + $0x50] sm:$0xff]
    %v1011 = vld [vmem:[#allocation4 + $0x58] sm:$0xff]
    %v1012 = vld [vmem:[#allocation4 + $0x60] sm:$0xff]
    %v1013 = vld [vmem:[#allocation4 + $0x68] sm:$0xff]
    %v1014 = vld [vmem:[#allocation4 + $0x70] sm:$0xff]
    %v1015 = vld [vmem:[#allocation4 + $0x78] sm:$0xff]
    %v1016 = vld [vmem:[%s7] sm:$0x1]
    %v1018 = vlaneseq
    %v1019 = vshrl.u32 %v1018, 7
    %v1020 = vsub.s32 0, %v1019
    %v1021 = vrot.slane %v1016, %v1020
    %1023 = vmatprep.subr.mxu0 0.0
    %1024 = vmatpush1.msra.mxu0 %v1015
    %1025 = vmatprep.subr.mxu0 0.0
    %1026 = vmatpush1.msra.mxu0 %v1014
    %1027 = vmatprep.subr.mxu0 0.0
    %1028 = vmatpush1.msra.mxu0 %v1013
    %1029 = vmatprep.subr.mxu0 0.0
    %1030 = vmatpush1.msra.mxu0 %v1012
    %1031 = vmatprep.subr.mxu0 0.0
    %1032 = vmatpush1.msra.mxu0 %v1011
    %1033 = vmatprep.subr.mxu0 0.0
    %1034 = vmatpush1.msra.mxu0 %v1010
    %1035 = vmatprep.subr.mxu0 0.0
    %1036 = vmatpush1.msra.mxu0 %v1009
    %1037 = vmatprep.subr.mxu0 0.0
    %1038 = vmatpush1.msra.mxu0 %v1008
    %1039 = vmatprep.subr.mxu0 0.0
    %1040 = vmatpush1.msra.mxu0 %v1007
    %1041 = vmatprep.subr.mxu0 0.0
    %1042 = vmatpush1.msra.mxu0 %v1006
    %1043 = vmatprep.subr.mxu0 0.0
    %1044 = vmatpush1.msra.mxu0 %v1005
    %1045 = vmatprep.subr.mxu0 0.0
    %1046 = vmatpush1.msra.mxu0 %v1004
    %1047 = vmatprep.subr.mxu0 0.0
    %1048 = vmatpush1.msra.mxu0 %v1003
    %1049 = vmatprep.subr.mxu0 0.0
    %1050 = vmatpush1.msra.mxu0 %v1002
    %1051 = vmatprep.subr.mxu0 0.0
    %1052 = vmatpush1.msra.mxu0 %v1001
    %1053 = vmatprep.subr.mxu0 0.0
    %1054 = vmatpush1.msra.mxu0 %v1000
    %1055 = vmatprep.subr.mxu0 0.0
    %1056 = vmatpush2.msra.mxu0 0.0
    %1057 = vmatprep.subr.mxu0 0.0
    %1058 = vmatpush2.msra.mxu0 0.0
    %1059 = vmatprep.subr.mxu0 0.0
    %1060 = vmatpush2.msra.mxu0 0.0
    %1061 = vmatprep.subr.mxu0 0.0
    %1062 = vmatpush2.msra.mxu0 0.0
    %1063 = vmatprep.subr.mxu0 0.0
    %1064 = vmatpush2.msra.mxu0 0.0
    %1065 = vmatprep.subr.mxu0 0.0
    %1066 = vmatpush2.msra.mxu0 0.0
    %1067 = vmatprep.subr.mxu0 0.0
    %1068 = vmatpush2.msra.mxu0 0.0
    %1069 = vmatprep.subr.mxu0 0.0
    %1070 = vmatpush2.msra.mxu0 0.0
    %1071 = vmatprep.subr.mxu0 0.0
    %1072 = vmatpush2.msra.mxu0 0.0
    %1073 = vmatprep.subr.mxu0 0.0
    %1074 = vmatpush2.msra.mxu0 0.0
    %1075 = vmatprep.subr.mxu0 0.0
    %1076 = vmatpush2.msra.mxu0 0.0
    %1077 = vmatprep.subr.mxu0 0.0
    %1078 = vmatpush2.msra.mxu0 0.0
    %1079 = vmatprep.subr.mxu0 0.0
    %1080 = vmatpush2.msra.mxu0 0.0
    %1081 = vmatprep.subr.mxu0 0.0
    %1082 = vmatpush2.msra.mxu0 0.0
    %1083 = vmatprep.subr.mxu0 0.0
    %1084 = vmatpush2.msra.mxu0 0.0
    %1085 = vmatprep.subr.mxu0 0.0
    %1086 = vmatpush2.msra.mxu0 0.0
    %1087 = vmatprep.mubr.f32.mxu0 0.0
    %1088 = vmatmul.mubr.f32.gmra.mxu0 %v999
    %v1089 = vpop.f32.mrf.mxu0
    %v1090 = vadd.f32 %v1021, %v1089
    %v1091 = vpop.f32.mrf.mxu0
    %1092 = vdwg.mxu0
    %v1093 = vtanh.pop %v1090
    %v1094 = vld [vmem:[#allocation6] sm:$0xff]
    %v1095 = vld [vmem:[#allocation6 + $0x8] sm:$0xff]
    %v1096 = vld [vmem:[#allocation6 + $0x10] sm:$0xff]
    %v1097 = vld [vmem:[#allocation6 + $0x18] sm:$0xff]
    %v1098 = vld [vmem:[#allocation6 + $0x20] sm:$0xff]
    %v1099 = vld [vmem:[#allocation6 + $0x28] sm:$0xff]
    %v1100 = vld [vmem:[#allocation6 + $0x30] sm:$0xff]
    %v1101 = vld [vmem:[#allocation6 + $0x38] sm:$0xff]
    %v1102 = vld [vmem:[#allocation6 + $0x40] sm:$0xff]
    %v1103 = vld [vmem:[#allocation6 + $0x48] sm:$0xff]
    %v1104 = vld [vmem:[#allocation6 + $0x50] sm:$0xff]
    %v1105 = vld [vmem:[#allocation6 + $0x58] sm:$0xff]
    %v1106 = vld [vmem:[#allocation6 + $0x60] sm:$0xff]
    %v1107 = vld [vmem:[#allocation6 + $0x68] sm:$0xff]
    %v1108 = vld [vmem:[#allocation6 + $0x70] sm:$0xff]
    %v1109 = vld [vmem:[#allocation6 + $0x78] sm:$0xff]
    %v1110 = vld [vmem:[%s9] sm:$0x1]
    %v1112 = vlaneseq
    %v1113 = vshrl.u32 %v1112, 7
    %v1114 = vsub.s32 0, %v1113
    %v1115 = vrot.slane %v1110, %v1114
    %1117 = vmatprep.subr.mxu0 0.0
    %1118 = vmatpush1.msra.mxu0 %v1109
    %1119 = vmatprep.subr.mxu0 0.0
    %1120 = vmatpush1.msra.mxu0 %v1108
    %1121 = vmatprep.subr.mxu0 0.0
    %1122 = vmatpush1.msra.mxu0 %v1107
    %1123 = vmatprep.subr.mxu0 0.0
    %1124 = vmatpush1.msra.mxu0 %v1106
    %1125 = vmatprep.subr.mxu0 0.0
    %1126 = vmatpush1.msra.mxu0 %v1105
    %1127 = vmatprep.subr.mxu0 0.0
    %1128 = vmatpush1.msra.mxu0 %v1104
    %1129 = vmatprep.subr.mxu0 0.0
    %1130 = vmatpush1.msra.mxu0 %v1103
    %1131 = vmatprep.subr.mxu0 0.0
    %1132 = vmatpush1.msra.mxu0 %v1102
    %1133 = vmatprep.subr.mxu0 0.0
    %1134 = vmatpush1.msra.mxu0 %v1101
    %1135 = vmatprep.subr.mxu0 0.0
    %1136 = vmatpush1.msra.mxu0 %v1100
    %1137 = vmatprep.subr.mxu0 0.0
    %1138 = vmatpush1.msra.mxu0 %v1099
    %1139 = vmatprep.subr.mxu0 0.0
    %1140 = vmatpush1.msra.mxu0 %v1098
    %1141 = vmatprep.subr.mxu0 0.0
    %1142 = vmatpush1.msra.mxu0 %v1097
    %1143 = vmatprep.subr.mxu0 0.0
    %1144 = vmatpush1.msra.mxu0 %v1096
    %1145 = vmatprep.subr.mxu0 0.0
    %1146 = vmatpush1.msra.mxu0 %v1095
    %1147 = vmatprep.subr.mxu0 0.0
    %1148 = vmatpush1.msra.mxu0 %v1094
    %1149 = vmatprep.subr.mxu0 0.0
    %1150 = vmatpush2.msra.mxu0 0.0
    %1151 = vmatprep.subr.mxu0 0.0
    %1152 = vmatpush2.msra.mxu0 0.0
    %1153 = vmatprep.subr.mxu0 0.0
    %1154 = vmatpush2.msra.mxu0 0.0
    %1155 = vmatprep.subr.mxu0 0.0
    %1156 = vmatpush2.msra.mxu0 0.0
    %1157 = vmatprep.subr.mxu0 0.0
    %1158 = vmatpush2.msra.mxu0 0.0
    %1159 = vmatprep.subr.mxu0 0.0
    %1160 = vmatpush2.msra.mxu0 0.0
    %1161 = vmatprep.subr.mxu0 0.0
    %1162 = vmatpush2.msra.mxu0 0.0
    %1163 = vmatprep.subr.mxu0 0.0
    %1164 = vmatpush2.msra.mxu0 0.0
    %1165 = vmatprep.subr.mxu0 0.0
    %1166 = vmatpush2.msra.mxu0 0.0
    %1167 = vmatprep.subr.mxu0 0.0
    %1168 = vmatpush2.msra.mxu0 0.0
    %1169 = vmatprep.subr.mxu0 0.0
    %1170 = vmatpush2.msra.mxu0 0.0
    %1171 = vmatprep.subr.mxu0 0.0
    %1172 = vmatpush2.msra.mxu0 0.0
    %1173 = vmatprep.subr.mxu0 0.0
    %1174 = vmatpush2.msra.mxu0 0.0
    %1175 = vmatprep.subr.mxu0 0.0
    %1176 = vmatpush2.msra.mxu0 0.0
    %1177 = vmatprep.subr.mxu0 0.0
    %1178 = vmatpush2.msra.mxu0 0.0
    %1179 = vmatprep.subr.mxu0 0.0
    %1180 = vmatpush2.msra.mxu0 0.0
    %1181 = vmatprep.mubr.f32.mxu0 0.0
    %1182 = vmatmul.mubr.f32.gmra.mxu0 %v1093
    %v1183 = vpop.f32.mrf.mxu0
    %v1184 = vadd.f32 %v1115, %v1183
    %v1185 = vpop.f32.mrf.mxu0
    %1186 = vdwg.mxu0
    %1187 = vmax.xlane.f32.xlu0 %v1184
    %v1188 = vpop.xlane.xlu0 %1187
    %v1189 = vsub.f32 %v1184, %v1188
    %v1190 = vmul.f32 %v1189, 1.442695
    %v1191 = vpow.pop %v1190
    %1192 = vadd.xlane.f32.xlu0 %v1191
    %v1193 = vpop.xlane.xlu0 %1192
    %v1194 = vlog2.pop %v1193
    %v1195 = vmul.f32 %v1194, 0.6931472
    %v1196 = vsub.f32 %v1189, %v1195
    %1197 = vst [vmem:[%s10] sm:$0xff] %v1196
    // Predicated region
    $region54: #{pair_classifier_forward.1} parent=1 // pred_check
      _
    $region55: #{pair_classifier_forward.1} parent=1 // pred_check_branch
      %1199 = sbr.rel (0) target = $region57
    $region56: #{pair_classifier_forward.1} parent=1 // pred_region
      _
    $region57: #{pair_classifier_forward.1} parent=1 // pred_fallthru
      _
    // Predicated region
    $region58: #{pair_classifier_forward.1} parent=1 // pred_check
      _
    $region59: #{pair_classifier_forward.1} parent=1 // pred_check_branch
      %1201 = sbr.rel (0) target = $region61
    $region60: #{pair_classifier_forward.1} parent=1 // pred_region
      _
    $region61: #{pair_classifier_forward.1} parent=1 // pred_fallthru
      _
    %1202 = vsyncpa [#allocation3], 1
    %1203 = vsyncpa [#allocation5], 1

</llo_original>
